<compile_context>
chip_gen: v7x
topology: tpu7x:2x2x1
jax: 0.10.0
libtpu: 0.0.40
codegen_flags: <defaults>
</compile_context>

<pallas_src>
import math
import jax
import jax.numpy as jnp
import numpy as np
from jax import lax
from jax.experimental import pallas as pl
from jax.experimental.pallas import tpu as pltpu

_EPS = 1e-5


# --------------------------------------------------------------------------- #
# Pass 1: edge compute + scatter-add + GraphNorm moments; node finalize.
# Grid: (E // tE,), sequential ("arbitrary") because of the accumulators.
# --------------------------------------------------------------------------- #
def _agnn_pass1_kernel(
    # tiled edge inputs
    noise_ref, src_oh_ref, dst_oh_ref, edge_bm_ref,
    # resident node / graph inputs
    feat_ref, node_b_ref, node_bm_ref, temb_ref,
    # resident weights
    w_np_ref, b_np_ref, w_quvr_ref, b_quvr_ref,
    gnh_g_ref, gnh_b_ref, gnh_ms_ref,
    gne_g_ref, gne_ms_ref,
    w_t_ref, b_t_ref,
    # outputs
    ehat_ref, noiseh_ref, h_out_ref, eaff_ref,
    # scratch (persist across grid steps)
    quvr_bf_ref, u_ref, aggr_ref, estat_ref,
):
    f32 = jnp.float32
    bf16 = jnp.bfloat16
    H = feat_ref.shape[1]
    step = pl.program_id(0)
    last = pl.num_programs(0) - 1

    def mm(a, b):
        return jnp.dot(a, b, preferred_element_type=f32)

    def mm_t(a, b):
        # a.T @ b without materializing the transpose (contract dim 0 of both).
        return lax.dot_general(a, b, dimension_numbers=(((0,), (0,)), ((), ())),
                               preferred_element_type=f32)

    # ---- step 0: fused node linears [Q | R | V | U] + accumulator init -------
    @pl.when(step == 0)
    def _():
        quvr = mm(feat_ref[...], w_quvr_ref[...]) + b_quvr_ref[...]      # [N,4H]
        quvr_bf_ref[...] = quvr.astype(bf16)      # bf16 gather table for the MXU
        u_ref[...] = quvr[:, 3 * H:4 * H]         # keep U head in f32
        aggr_ref[...] = jnp.zeros_like(aggr_ref)
        estat_ref[...] = jnp.zeros_like(estat_ref)

    # ---- per-edge-tile work ---------------------------------------------------
    # fused noise path: [edge_transform(x) | P(edge_transform(x))]
    noise_pack = mm(noise_ref[...], w_np_ref[...]) + b_np_ref[...]        # [tE,2H]
    noise_h = noise_pack[:, :H]
    p_noise = noise_pack[:, H:]

    quvr_bf = quvr_bf_ref[...]                                            # [N,4H] bf16
    g_src = mm(src_oh_ref[...], quvr_bf)      # bf16 x bf16, f32 acc  -> [tE,4H]
    g_dst = mm(dst_oh_ref[...], quvr_bf)                                  # [tE,4H]
    q_src = g_src[:, 0:H]
    r_dst = g_dst[:, H:2 * H]
    v_dst = g_dst[:, 2 * H:3 * H]

    e_hat = p_noise + q_src + r_dst                                       # [tE,H]
    gates = jax.nn.sigmoid(e_hat)
    msg = (v_dst * gates).astype(bf16)

    # scatter-add over src nodes (global_add_pool) on the MXU (bf16 path)
    aggr_ref[...] += mm_t(src_oh_ref[...], msg)                           # [N,H]
    # per-graph first / second moments of e_hat (edge GraphNorm), f32
    estat_ref[...] += mm_t(edge_bm_ref[...],
                           jnp.concatenate([e_hat, e_hat * e_hat], axis=-1))

    ehat_ref[...] = e_hat
    noiseh_ref[...] = noise_h

    # ---- last step: node GraphNorm + residual, edge affine/time-emb table ----
    @pl.when(step == last)
    def _():
        h = u_ref[...] + aggr_ref[...]                                    # [N,H]
        st = mm_t(node_bm_ref[...], jnp.concatenate([h, h * h], axis=-1))  # [B,2H]
        mu = st[:, :H]
        ex2 = st[:, H:]
        shift = gnh_ms_ref[...] * mu
        var = ex2 - 2.0 * shift * mu + shift * shift
        scale = gnh_g_ref[...] * lax.rsqrt(var + _EPS)
        bc = mm(node_b_ref[...], jnp.concatenate([shift, scale], axis=-1))  # [N,2H]
        h_n = (h - bc[:, :H]) * bc[:, H:] + gnh_b_ref[...]
        h_out_ref[...] = feat_ref[...] + jnp.maximum(h_n, 0.0)

        mu_e = estat_ref[:, :H]
        ex2_e = estat_ref[:, H:]
        shift_e = gne_ms_ref[...] * mu_e
        var_e = ex2_e - 2.0 * shift_e * mu_e + shift_e * shift_e
        scale_e = gne_g_ref[...] * lax.rsqrt(var_e + _EPS)
        t_feat = mm(jnp.maximum(temb_ref[...], 0.0), w_t_ref[...]) + b_t_ref[...]
        # packed per-graph table for pass 2: [ms*mu | gamma*inv_std | t_feat]
        eaff_ref[...] = jnp.concatenate([shift_e, scale_e, t_feat], axis=-1)


# --------------------------------------------------------------------------- #
# Pass 2: apply edge GraphNorm + time emb + LayerNorm/SiLU/Linear + residual.
# Pure per-edge map -> "parallel" grid axis (both TCs on v7x).
# --------------------------------------------------------------------------- #
def _agnn_pass2_kernel(
    ehat_ref, noiseh_ref, edge_b_ref, eaff_ref,
    gne_b_ref, ln_g_ref, ln_b_ref, w_o_ref, b_o_ref,
    e_out_ref,
):
    f32 = jnp.float32
    H = ehat_ref.shape[1]
    # broadcast per-graph (shift | scale | t_feat) to edges in one matmul
    bc = jnp.dot(edge_b_ref[...], eaff_ref[...], preferred_element_type=f32)  # [tE,3H]
    e_n = (ehat_ref[...] - bc[:, :H]) * bc[:, H:2 * H] + gne_b_ref[...]
    e_n = jnp.maximum(e_n, 0.0) + bc[:, 2 * H:3 * H]
    # out_layer = LayerNorm(H) -> SiLU -> Linear(H, H)
    mu = jnp.mean(e_n, axis=-1, keepdims=True)
    var = jnp.mean((e_n - mu) ** 2, axis=-1, keepdims=True)
    ln = (e_n - mu) * lax.rsqrt(var + _EPS) * ln_g_ref[...] + ln_b_ref[...]
    silu = ln * jax.nn.sigmoid(ln)
    e_out_ref[...] = (noiseh_ref[...]
                      + jnp.dot(silu, w_o_ref[...], preferred_element_type=f32)
                      + b_o_ref[...])


# --------------------------------------------------------------------------- #
# Wrapper glue
# --------------------------------------------------------------------------- #
def _pick_edge_tile(E, tile_e):
    if E <= tile_e:
        return E
    t = (min(tile_e, E) // 8) * 8
    while t >= 8:
        if E % t == 0:
            return t
        t -= 8
    return E


def _padded_bytes(shape, dtype):
    itemsize = jnp.dtype(dtype).itemsize
    s = list(shape)
    if len(s) >= 1:
        s[-1] = -(-s[-1] // 128) * 128
    if len(s) >= 2:
        sub = 16 if itemsize == 2 else 8
        s[-2] = -(-s[-2] // sub) * sub
    n = 1
    for d in s:
        n *= int(d)
    return n * itemsize


def _vmem_limit(block_specs, scratch_specs):
    # block_specs / scratch_specs: iterables of (shape, dtype)
    need = sum(2 * _padded_bytes(s, d) for s, d in block_specs)
    need += sum(_padded_bytes(s, d) for s, d in scratch_specs)
    need += 4 << 20                                   # Mosaic internal headroom
    try:
        cap = int(pltpu.get_tpu_info().vmem_capacity_bytes)
    except Exception:
        cap = 64 << 20                                # conservative fallback
    hi = (cap * 85) // 100                            # leave headroom (v7x: ~54MiB)
    return int(min(max(need, 16 << 20), hi))


def agnn_forward(params, features, edge_mapping_idx, noise_mapping_emb, time_emb,
                 batch, *, tile_e=256):
    f32, bf16 = jnp.float32, jnp.bfloat16
    N, H = features.shape
    E, Dn = noise_mapping_emb.shape
    B, T = time_emb.shape
    src = edge_mapping_idx[0]
    dst = edge_mapping_idx[1]
    ebatch = batch[src]

    # gather/scatter operators: big [E,N] ones as bf16 (exact 0/1, full-rate
    # MXU), small [*,B] graph operators kept f32 for the norm statistics.
    src_oh = jax.nn.one_hot(src, N, dtype=bf16)                 # [E, N]
    dst_oh = jax.nn.one_hot(dst, N, dtype=bf16)                 # [E, N]
    node_b = jax.nn.one_hot(batch, B, dtype=f32)                # [N, B]
    edge_b = jax.nn.one_hot(ebatch, B, dtype=f32)               # [E, B]

    # fold 1/count into the reduce operators; guard empty graphs (no inf/NaN).
    n_cnt = jnp.sum(node_b, axis=0)
    e_cnt = jnp.sum(edge_b, axis=0)
    inv_n = jnp.where(n_cnt > 0, 1.0 / jnp.maximum(n_cnt, 1.0), 0.0)
    inv_e = jnp.where(e_cnt > 0, 1.0 / jnp.maximum(e_cnt, 1.0), 0.0)
    node_bm = node_b * inv_n[None, :]                           # [N, B]
    edge_bm = edge_b * inv_e[None, :]                           # [E, B]

    # ---- weight packing (pure glue) ------------------------------------------
    w_et, b_et = params["w_et"], params["b_et"]
    w_p, b_p = params["w_p"], params["b_p"]
    w_np = jnp.concatenate([w_et, w_et @ w_p], axis=1)          # [Dn, 2H]
    b_np = jnp.concatenate([b_et, b_et @ w_p + b_p], axis=1)    # [1, 2H]
    # lane-dense [H, 128] pack; order [Q | R | V | U]
    w_quvr = jnp.concatenate(
        [params["w_q"], params["w_r"], params["w_v"], params["w_u"]], axis=1)
    b_quvr = jnp.concatenate(
        [params["b_q"], params["b_r"], params["b_v"], params["b_u"]], axis=1)

    te = _pick_edge_tile(E, tile_e)
    grid = (E // te,)

    def e_tiled(width):
        return pl.BlockSpec((te, width), lambda i: (i, 0))

    def resident(shape):
        nd = len(shape)
        return pl.BlockSpec(shape, lambda i, _nd=nd: (0,) * _nd)

    # ------------------------------- pass 1 -----------------------------------
    p1_in_specs = [
        e_tiled(Dn), e_tiled(N), e_tiled(N), e_tiled(B),
        resident((N, H)), resident((N, B)), resident((N, B)), resident((B, T)),
        resident((Dn, 2 * H)), resident((1, 2 * H)),
        resident((H, 4 * H)), resident((1, 4 * H)),
        resident((1, H)), resident((1, H)), resident((1, H)),
        resident((1, H)), resident((1, H)),
        resident((T, H)), resident((1, H)),
    ]
    p1_out_specs = (e_tiled(H), e_tiled(H), resident((N, H)), resident((B, 3 * H)))
    p1_out_shape = (
        jax.ShapeDtypeStruct((E, H), f32),        # e_hat
        jax.ShapeDtypeStruct((E, H), f32),        # noise_h (edge_transform output)
        jax.ShapeDtypeStruct((N, H), f32),        # h_final
        jax.ShapeDtypeStruct((B, 3 * H), f32),    # per-graph [shift|scale|t_feat]
    )
    p1_scratch = [
        pltpu.VMEM((N, 4 * H), bf16),             # packed Q|R|V|U gather table
        pltpu.VMEM((N, H), f32),                  # U head (f32)
        pltpu.VMEM((N, H), f32),                  # scatter-add accumulator
        pltpu.VMEM((B, 2 * H), f32),              # edge moment accumulator
    ]
    vmem1 = _vmem_limit(
        [((te, Dn), f32), ((te, N), bf16), ((te, N), bf16), ((te, B), f32),
         ((N, H), f32), ((N, B), f32), ((N, B), f32), ((B, T), f32),
         ((Dn, 2 * H), f32), ((H, 4 * H), f32), ((T, H), f32),
         ((te, H), f32), ((te, H), f32), ((N, H), f32), ((B, 3 * H), f32)],
        [((N, 4 * H), bf16), ((N, H), f32), ((N, H), f32), ((B, 2 * H), f32)],
    )
    pass1 = pl.pallas_call(
        _agnn_pass1_kernel,
        grid=grid,
        in_specs=p1_in_specs,
        out_specs=p1_out_specs,
        out_shape=p1_out_shape,
        scratch_shapes=p1_scratch,
        compiler_params=pltpu.CompilerParams(
            dimension_semantics=("arbitrary",), vmem_limit_bytes=vmem1),
    )
    e_hat, noise_h, h_final, e_aff = pass1(
        noise_mapping_emb.astype(f32), src_oh, dst_oh, edge_bm,
        features.astype(f32), node_b, node_bm, time_emb.astype(f32),
        w_np, b_np, w_quvr, b_quvr,
        params["gnh_g"], params["gnh_b"], params["gnh_ms"],
        params["gne_g"], params["gne_ms"],
        params["w_t"], params["b_t"],
    )

    # ------------------------------- pass 2 -----------------------------------
    vmem2 = _vmem_limit(
        [((te, H), f32), ((te, H), f32), ((te, B), f32), ((B, 3 * H), f32),
         ((H, H), f32), ((te, H), f32)],
        [],
    )
    pass2 = pl.pallas_call(
        _agnn_pass2_kernel,
        grid=grid,
        in_specs=[e_tiled(H), e_tiled(H), e_tiled(B), resident((B, 3 * H)),
                  resident((1, H)), resident((1, H)), resident((1, H)),
                  resident((H, H)), resident((1, H))],
        out_specs=e_tiled(H),
        out_shape=jax.ShapeDtypeStruct((E, H), f32),
        compiler_params=pltpu.CompilerParams(
            dimension_semantics=("parallel",), vmem_limit_bytes=vmem2),
    )
    e_final = pass2(e_hat, noise_h, edge_b, e_aff,
                    params["gne_b"], params["ln_g"], params["ln_b"],
                    params["w_o"], params["b_o"])
    return h_final, e_final


# ----------------------------- pure-JAX reference -----------------------------
def agnn_reference(params, features, edge_mapping_idx, noise_mapping_emb, time_emb, batch):
    src, dst = edge_mapping_idx[0], edge_mapping_idx[1]
    N, H = features.shape
    B = time_emb.shape[0]
    eps = 1e-5

    def lin(x, w, b):
        return x @ w + b

    noise_h = lin(noise_mapping_emb, params["w_et"], params["b_et"])
    Q_h = lin(features, params["w_q"], params["b_q"])
    R_h = lin(features, params["w_r"], params["b_r"])
    e_hat = lin(noise_h, params["w_p"], params["b_p"]) + Q_h[src] + R_h[dst]
    gates = jax.nn.sigmoid(e_hat)
    U_h = lin(features, params["w_u"], params["b_u"])
    V_h = lin(features, params["w_v"], params["b_v"])
    aggr = jax.ops.segment_sum(V_h[dst] * gates, src, num_segments=N)
    h = U_h + aggr

    def graph_norm(x, seg, g, b, ms):
        cnt = jax.ops.segment_sum(jnp.ones((x.shape[0],), x.dtype), seg, num_segments=B)[:, None]
        mean = jax.ops.segment_sum(x, seg, num_segments=B) / cnt
        out = x - mean[seg] * ms
        var = jax.ops.segment_sum(out * out, seg, num_segments=B) / cnt
        std = jnp.sqrt(var + eps)
        return g * out / std[seg] + b

    h = graph_norm(h, batch, params["gnh_g"], params["gnh_b"], params["gnh_ms"])
    e = graph_norm(e_hat, batch[src], params["gne_g"], params["gne_b"], params["gne_ms"])
    h = jax.nn.relu(h)
    e = jax.nn.relu(e)
    t_feat = lin(jax.nn.relu(time_emb), params["w_t"], params["b_t"])
    e = e + t_feat[batch[src]]
    h = features + h
    mu = jnp.mean(e, axis=-1, keepdims=True)
    var = jnp.mean((e - mu) ** 2, axis=-1, keepdims=True)
    ln = (e - mu) / jnp.sqrt(var + eps) * params["ln_g"] + params["ln_b"]
    silu = ln * jax.nn.sigmoid(ln)
    e = noise_h + lin(silu, params["w_o"], params["b_o"])
    return h, e


def init_linear(key, fan_in, fan_out):
    k1, k2 = jax.random.split(key)
    bound = 1.0 / math.sqrt(fan_in)
    w = jax.random.uniform(k1, (fan_in, fan_out), jnp.float32, -bound, bound)
    b = jax.random.uniform(k2, (1, fan_out), jnp.float32, -bound, bound)
    return w, b


if __name__ == "__main__":
    key = jax.random.PRNGKey(0)
    H, T, Dn = 32, 16, 8            # hidden_dim, time_emb_dim, noise_dim
    B, npg = 2, 8                   # graphs, nodes per graph
    N = B * npg
    E = 2 * N                       # every node appears (twice) as a source

    keys = jax.random.split(key, 16)
    params = {}
    params["w_et"], params["b_et"] = init_linear(keys[0], Dn, H)
    params["w_p"], params["b_p"] = init_linear(keys[1], H, H)
    params["w_q"], params["b_q"] = init_linear(keys[2], H, H)
    params["w_r"], params["b_r"] = init_linear(keys[3], H, H)
    params["w_u"], params["b_u"] = init_linear(keys[4], H, H)
    params["w_v"], params["b_v"] = init_linear(keys[5], H, H)
    params["w_t"], params["b_t"] = init_linear(keys[6], T, H)
    params["w_o"], params["b_o"] = init_linear(keys[7], H, H)
    params["gnh_g"] = jnp.ones((1, H), jnp.float32)
    params["gnh_b"] = jnp.zeros((1, H), jnp.float32)
    params["gnh_ms"] = jnp.ones((1, H), jnp.float32)
    params["gne_g"] = jnp.ones((1, H), jnp.float32)
    params["gne_b"] = jnp.zeros((1, H), jnp.float32)
    params["gne_ms"] = jnp.ones((1, H), jnp.float32)
    params["ln_g"] = jnp.ones((1, H), jnp.float32)
    params["ln_b"] = jnp.zeros((1, H), jnp.float32)

    # Inputs
    features = jax.random.normal(keys[8], (N, H), jnp.float32)
    noise_mapping_emb = jax.random.normal(keys[9], (E, Dn), jnp.float32)
    time_emb = jax.random.normal(keys[10], (B, T), jnp.float32)
    batch = jnp.repeat(jnp.arange(B, dtype=jnp.int32), npg)        # [N]

    # Bipartite-style mapping edges, kept within each graph.
    src = jnp.concatenate([jnp.arange(N, dtype=jnp.int32),
                           jnp.arange(N, dtype=jnp.int32)])        # [E]
    g = src // npg
    local = src % npg
    off = jnp.concatenate([jnp.full((N,), 1, jnp.int32), jnp.full((N,), 3, jnp.int32)])
    dst = g * npg + (local + off) % npg
    edge_mapping_idx = jnp.stack([src, dst])                       # [2, E]

    # tile_e=16 -> edge grid of 2 steps per pass (exercises the pipeline).
    h_k, e_k = agnn_forward(params, features, edge_mapping_idx,
                            noise_mapping_emb, time_emb, batch, tile_e=16)
    jax.block_until_ready((h_k, e_k))

    h_r, e_r = agnn_reference(params, features, edge_mapping_idx,
                              noise_mapping_emb, time_emb, batch)
    # bf16 MXU gather/scatter path (perf-review item 1) -> re-validated, looser
    # tolerance than the pure-f32 version (bf16 rounding of the gathered values).
    np.testing.assert_allclose(np.asarray(h_k), np.asarray(h_r), rtol=2e-2, atol=2e-2)
    np.testing.assert_allclose(np.asarray(e_k), np.asarray(e_r), rtol=2e-2, atol=2e-2)

    print("KERNEL_OK")
</pallas_src>

<mosaic_0001>
module attributes {stable_mosaic.version = 11 : i64} {
  func.func @_agnn_pass1_kernel(%arg0: i32, %arg1: memref<16x8xf32, #tpu.memory_space<vmem>>, %arg2: memref<16x16xbf16, #tpu.memory_space<vmem>>, %arg3: memref<16x16xbf16, #tpu.memory_space<vmem>>, %arg4: memref<16x2xf32, #tpu.memory_space<vmem>>, %arg5: memref<16x32xf32, #tpu.memory_space<vmem>>, %arg6: memref<16x2xf32, #tpu.memory_space<vmem>>, %arg7: memref<16x2xf32, #tpu.memory_space<vmem>>, %arg8: memref<2x16xf32, #tpu.memory_space<vmem>>, %arg9: memref<8x64xf32, #tpu.memory_space<vmem>>, %arg10: memref<1x64xf32, #tpu.memory_space<vmem>>, %arg11: memref<32x128xf32, #tpu.memory_space<vmem>>, %arg12: memref<1x128xf32, #tpu.memory_space<vmem>>, %arg13: memref<1x32xf32, #tpu.memory_space<vmem>>, %arg14: memref<1x32xf32, #tpu.memory_space<vmem>>, %arg15: memref<1x32xf32, #tpu.memory_space<vmem>>, %arg16: memref<1x32xf32, #tpu.memory_space<vmem>>, %arg17: memref<1x32xf32, #tpu.memory_space<vmem>>, %arg18: memref<16x32xf32, #tpu.memory_space<vmem>>, %arg19: memref<1x32xf32, #tpu.memory_space<vmem>>, %arg20: memref<16x32xf32, #tpu.memory_space<vmem>>, %arg21: memref<16x32xf32, #tpu.memory_space<vmem>>, %arg22: memref<16x32xf32, #tpu.memory_space<vmem>>, %arg23: memref<2x96xf32, #tpu.memory_space<vmem>>, %arg24: memref<16x128xbf16, #tpu.memory_space<vmem>>, %arg25: memref<16x32xf32, #tpu.memory_space<vmem>>, %arg26: memref<16x32xf32, #tpu.memory_space<vmem>>, %arg27: memref<2x64xf32, #tpu.memory_space<vmem>>) attributes {dimension_semantics = [#tpu.dimension_semantics<arbitrary>], iteration_bounds = array<i64: 2>, scalar_prefetch = 0 : i64, scratch_operands = 4 : i64, tpu.core_type = #tpu.core_type<tc>, window_params = [{transform_indices = @transform_0, window_bounds = array<i64: 16, 8>}, {transform_indices = @transform_1, window_bounds = array<i64: 16, 16>}, {transform_indices = @transform_2, window_bounds = array<i64: 16, 16>}, {transform_indices = @transform_3, window_bounds = array<i64: 16, 2>}, {pipeline_mode = #tpu.pipeline_mode<synchronous>, transform_indices = @transform_4, window_bounds = array<i64: 16, 32>}, {pipeline_mode = #tpu.pipeline_mode<synchronous>, transform_indices = @transform_5, window_bounds = array<i64: 16, 2>}, {pipeline_mode = #tpu.pipeline_mode<synchronous>, transform_indices = @transform_6, window_bounds = array<i64: 16, 2>}, {pipeline_mode = #tpu.pipeline_mode<synchronous>, transform_indices = @transform_7, window_bounds = array<i64: 2, 16>}, {pipeline_mode = #tpu.pipeline_mode<synchronous>, transform_indices = @transform_8, window_bounds = array<i64: 8, 64>}, {pipeline_mode = #tpu.pipeline_mode<synchronous>, transform_indices = @transform_9, window_bounds = array<i64: 1, 64>}, {pipeline_mode = #tpu.pipeline_mode<synchronous>, transform_indices = @transform_10, window_bounds = array<i64: 32, 128>}, {pipeline_mode = #tpu.pipeline_mode<synchronous>, transform_indices = @transform_11, window_bounds = array<i64: 1, 128>}, {pipeline_mode = #tpu.pipeline_mode<synchronous>, transform_indices = @transform_12, window_bounds = array<i64: 1, 32>}, {pipeline_mode = #tpu.pipeline_mode<synchronous>, transform_indices = @transform_13, window_bounds = array<i64: 1, 32>}, {pipeline_mode = #tpu.pipeline_mode<synchronous>, transform_indices = @transform_14, window_bounds = array<i64: 1, 32>}, {pipeline_mode = #tpu.pipeline_mode<synchronous>, transform_indices = @transform_15, window_bounds = array<i64: 1, 32>}, {pipeline_mode = #tpu.pipeline_mode<synchronous>, transform_indices = @transform_16, window_bounds = array<i64: 1, 32>}, {pipeline_mode = #tpu.pipeline_mode<synchronous>, transform_indices = @transform_17, window_bounds = array<i64: 16, 32>}, {pipeline_mode = #tpu.pipeline_mode<synchronous>, transform_indices = @transform_18, window_bounds = array<i64: 1, 32>}, {transform_indices = @transform_19, window_bounds = array<i64: 16, 32>}, {transform_indices = @transform_20, window_bounds = array<i64: 16, 32>}, {pipeline_mode = #tpu.pipeline_mode<synchronous>, transform_indices = @transform_21, window_bounds = array<i64: 16, 32>}, {pipeline_mode = #tpu.pipeline_mode<synchronous>, transform_indices = @transform_22, window_bounds = array<i64: 2, 96>}]} {
    %c0_i32 = arith.constant 0 : i32
    %0 = arith.cmpi eq, %arg0, %c0_i32 : i32
    %1 = arith.extui %0 : i1 to i32
    %c0_i32_0 = arith.constant 0 : i32
    %2 = arith.cmpi ne, %1, %c0_i32_0 : i32
    scf.if %2 {
      %c0_34 = arith.constant 0 : index
      %c0_35 = arith.constant 0 : index
      %45 = vector.load %arg5[%c0_34, %c0_35] : memref<16x32xf32, #tpu.memory_space<vmem>>, vector<16x32xf32>
      %c0_36 = arith.constant 0 : index
      %c0_37 = arith.constant 0 : index
      %46 = vector.load %arg11[%c0_36, %c0_37] : memref<32x128xf32, #tpu.memory_space<vmem>>, vector<32x128xf32>
      %cst_38 = arith.constant dense<0.000000e+00> : vector<16x128xf32>
      %47 = tpu.matmul %45, %46, %cst_38 {dimension_numbers = #tpu.dot_dimension_numbers<[1], [0], [0], [1], [0, 0, 1, 1], [], []>} : vector<16x32xf32>, vector<32x128xf32>, vector<16x128xf32> -> vector<16x128xf32>
      %c0_39 = arith.constant 0 : index
      %c0_40 = arith.constant 0 : index
      %48 = vector.load %arg12[%c0_39, %c0_40] : memref<1x128xf32, #tpu.memory_space<vmem>>, vector<1x128xf32>
      %49 = vector.broadcast %48 : vector<1x128xf32> to vector<16x128xf32>
      %50 = arith.addf %47, %49 : vector<16x128xf32>
      %51 = arith.truncf %50 : vector<16x128xf32> to vector<16x128xbf16>
      %c0_41 = arith.constant 0 : index
      %c0_42 = arith.constant 0 : index
      %52 = vector.load %arg24[%c0_41, %c0_42] : memref<16x128xbf16, #tpu.memory_space<vmem>>, vector<16x128xbf16>
      tpu.vector_store %arg24[%c0_41, %c0_42], %51 {strides = array<i32>} : memref<16x128xbf16, #tpu.memory_space<vmem>>, vector<16x128xbf16>,
      %53 = vector.extract_strided_slice %50 {offsets = [0, 96], sizes = [16, 32], strides = [1, 1]} : vector<16x128xf32> to vector<16x32xf32>
      %c0_43 = arith.constant 0 : index
      %c0_44 = arith.constant 0 : index
      %54 = vector.load %arg25[%c0_43, %c0_44] : memref<16x32xf32, #tpu.memory_space<vmem>>, vector<16x32xf32>
      tpu.vector_store %arg25[%c0_43, %c0_44], %53 {strides = array<i32>} : memref<16x32xf32, #tpu.memory_space<vmem>>, vector<16x32xf32>,
      %cst_45 = arith.constant 0.000000e+00 : f32
      %55 = vector.broadcast %cst_45 : f32 to vector<16x32xf32>
      %c0_46 = arith.constant 0 : index
      %c0_47 = arith.constant 0 : index
      %56 = vector.load %arg26[%c0_46, %c0_47] : memref<16x32xf32, #tpu.memory_space<vmem>>, vector<16x32xf32>
      tpu.vector_store %arg26[%c0_46, %c0_47], %55 {strides = array<i32>} : memref<16x32xf32, #tpu.memory_space<vmem>>, vector<16x32xf32>,
      %cst_48 = arith.constant 0.000000e+00 : f32
      %57 = vector.broadcast %cst_48 : f32 to vector<2x64xf32>
      %c0_49 = arith.constant 0 : index
      %c0_50 = arith.constant 0 : index
      %58 = vector.load %arg27[%c0_49, %c0_50] : memref<2x64xf32, #tpu.memory_space<vmem>>, vector<2x64xf32>
      tpu.vector_store %arg27[%c0_49, %c0_50], %57 {strides = array<i32>} : memref<2x64xf32, #tpu.memory_space<vmem>>, vector<2x64xf32>,
    } else {
    }
    %c0 = arith.constant 0 : index
    %c0_1 = arith.constant 0 : index
    %3 = vector.load %arg1[%c0, %c0_1] : memref<16x8xf32, #tpu.memory_space<vmem>>, vector<16x8xf32>
    %c0_2 = arith.constant 0 : index
    %c0_3 = arith.constant 0 : index
    %4 = vector.load %arg9[%c0_2, %c0_3] : memref<8x64xf32, #tpu.memory_space<vmem>>, vector<8x64xf32>
    %cst = arith.constant dense<0.000000e+00> : vector<16x64xf32>
    %5 = tpu.matmul %3, %4, %cst {dimension_numbers = #tpu.dot_dimension_numbers<[1], [0], [0], [1], [0, 0, 1, 1], [], []>} : vector<16x8xf32>, vector<8x64xf32>, vector<16x64xf32> -> vector<16x64xf32>
    %c0_4 = arith.constant 0 : index
    %c0_5 = arith.constant 0 : index
    %6 = vector.load %arg10[%c0_4, %c0_5] : memref<1x64xf32, #tpu.memory_space<vmem>>, vector<1x64xf32>
    %7 = vector.broadcast %6 : vector<1x64xf32> to vector<16x64xf32>
    %8 = arith.addf %5, %7 : vector<16x64xf32>
    %9 = vector.extract_strided_slice %8 {offsets = [0, 0], sizes = [16, 32], strides = [1, 1]} : vector<16x64xf32> to vector<16x32xf32>
    %10 = vector.extract_strided_slice %8 {offsets = [0, 32], sizes = [16, 32], strides = [1, 1]} : vector<16x64xf32> to vector<16x32xf32>
    %c0_6 = arith.constant 0 : index
    %c0_7 = arith.constant 0 : index
    %11 = vector.load %arg24[%c0_6, %c0_7] : memref<16x128xbf16, #tpu.memory_space<vmem>>, vector<16x128xbf16>
    %c0_8 = arith.constant 0 : index
    %c0_9 = arith.constant 0 : index
    %12 = vector.load %arg2[%c0_8, %c0_9] : memref<16x16xbf16, #tpu.memory_space<vmem>>, vector<16x16xbf16>
    %cst_10 = arith.constant dense<0.000000e+00> : vector<16x128xf32>
    %13 = tpu.matmul %12, %11, %cst_10 {dimension_numbers = #tpu.dot_dimension_numbers<[1], [0], [0], [1], [0, 0, 1, 1], [], []>} : vector<16x16xbf16>, vector<16x128xbf16>, vector<16x128xf32> -> vector<16x128xf32>
    %c0_11 = arith.constant 0 : index
    %c0_12 = arith.constant 0 : index
    %14 = vector.load %arg3[%c0_11, %c0_12] : memref<16x16xbf16, #tpu.memory_space<vmem>>, vector<16x16xbf16>
    %cst_13 = arith.constant dense<0.000000e+00> : vector<16x128xf32>
    %15 = tpu.matmul %14, %11, %cst_13 {dimension_numbers = #tpu.dot_dimension_numbers<[1], [0], [0], [1], [0, 0, 1, 1], [], []>} : vector<16x16xbf16>, vector<16x128xbf16>, vector<16x128xf32> -> vector<16x128xf32>
    %16 = vector.extract_strided_slice %13 {offsets = [0, 0], sizes = [16, 32], strides = [1, 1]} : vector<16x128xf32> to vector<16x32xf32>
    %17 = vector.extract_strided_slice %15 {offsets = [0, 32], sizes = [16, 32], strides = [1, 1]} : vector<16x128xf32> to vector<16x32xf32>
    %18 = vector.extract_strided_slice %15 {offsets = [0, 64], sizes = [16, 32], strides = [1, 1]} : vector<16x128xf32> to vector<16x32xf32>
    %19 = arith.addf %10, %16 : vector<16x32xf32>
    %20 = arith.addf %19, %17 : vector<16x32xf32>
    %21 = arith.negf %20 : vector<16x32xf32>
    %22 = math.exp %21 : vector<16x32xf32>
    %cst_14 = arith.constant 1.000000e+00 : f32
    %23 = vector.broadcast %cst_14 : f32 to vector<16x32xf32>
    %24 = arith.addf %23, %22 : vector<16x32xf32>
    %25 = arith.divf %23, %24 : vector<16x32xf32>
    %26 = arith.mulf %18, %25 : vector<16x32xf32>
    %27 = arith.truncf %26 : vector<16x32xf32> to vector<16x32xbf16>
    %c0_15 = arith.constant 0 : index
    %c0_16 = arith.constant 0 : index
    %28 = vector.load %arg26[%c0_15, %c0_16] : memref<16x32xf32, #tpu.memory_space<vmem>>, vector<16x32xf32>
    %c0_17 = arith.constant 0 : index
    %c0_18 = arith.constant 0 : index
    %29 = vector.load %arg2[%c0_17, %c0_18] : memref<16x16xbf16, #tpu.memory_space<vmem>>, vector<16x16xbf16>
    %cst_19 = arith.constant dense<0.000000e+00> : vector<16x32xf32>
    %30 = tpu.matmul %29, %27, %cst_19 {dimension_numbers = #tpu.dot_dimension_numbers<[0], [0], [1], [1], [0, 1, 1, 1], [], []>} : vector<16x16xbf16>, vector<16x32xbf16>, vector<16x32xf32> -> vector<16x32xf32>
    %31 = arith.addf %28, %30 : vector<16x32xf32>
    %c0_20 = arith.constant 0 : index
    %c0_21 = arith.constant 0 : index
    %32 = vector.load %arg26[%c0_20, %c0_21] : memref<16x32xf32, #tpu.memory_space<vmem>>, vector<16x32xf32>
    tpu.vector_store %arg26[%c0_20, %c0_21], %31 {strides = array<i32>} : memref<16x32xf32, #tpu.memory_space<vmem>>, vector<16x32xf32>,
    %c0_22 = arith.constant 0 : index
    %c0_23 = arith.constant 0 : index
    %33 = vector.load %arg27[%c0_22, %c0_23] : memref<2x64xf32, #tpu.memory_space<vmem>>, vector<2x64xf32>
    %c0_24 = arith.constant 0 : index
    %c0_25 = arith.constant 0 : index
    %34 = vector.load %arg4[%c0_24, %c0_25] : memref<16x2xf32, #tpu.memory_space<vmem>>, vector<16x2xf32>
    %35 = arith.mulf %20, %20 : vector<16x32xf32>
    %36 = tpu.concatenate %20, %35 in 1 : vector<16x32xf32>, vector<16x32xf32> -> vector<16x64xf32>
    %cst_26 = arith.constant dense<0.000000e+00> : vector<2x64xf32>
    %37 = tpu.matmul %34, %36, %cst_26 {dimension_numbers = #tpu.dot_dimension_numbers<[0], [0], [1], [1], [0, 1, 1, 1], [], []>} : vector<16x2xf32>, vector<16x64xf32>, vector<2x64xf32> -> vector<2x64xf32>
    %38 = arith.addf %33, %37 : vector<2x64xf32>
    %c0_27 = arith.constant 0 : index
    %c0_28 = arith.constant 0 : index
    %39 = vector.load %arg27[%c0_27, %c0_28] : memref<2x64xf32, #tpu.memory_space<vmem>>, vector<2x64xf32>
    tpu.vector_store %arg27[%c0_27, %c0_28], %38 {strides = array<i32>} : memref<2x64xf32, #tpu.memory_space<vmem>>, vector<2x64xf32>,
    %c0_29 = arith.constant 0 : index
    %c0_30 = arith.constant 0 : index
    %40 = vector.load %arg20[%c0_29, %c0_30] : memref<16x32xf32, #tpu.memory_space<vmem>>, vector<16x32xf32>
    tpu.vector_store %arg20[%c0_29, %c0_30], %20 {strides = array<i32>} : memref<16x32xf32, #tpu.memory_space<vmem>>, vector<16x32xf32>,
    %c0_31 = arith.constant 0 : index
    %c0_32 = arith.constant 0 : index
    %41 = vector.load %arg21[%c0_31, %c0_32] : memref<16x32xf32, #tpu.memory_space<vmem>>, vector<16x32xf32>
    tpu.vector_store %arg21[%c0_31, %c0_32], %9 {strides = array<i32>} : memref<16x32xf32, #tpu.memory_space<vmem>>, vector<16x32xf32>,
    %c1_i32 = arith.constant 1 : i32
    %42 = arith.cmpi eq, %arg0, %c1_i32 : i32
    %43 = arith.extui %42 : i1 to i32
    %c0_i32_33 = arith.constant 0 : i32
    %44 = arith.cmpi ne, %43, %c0_i32_33 : i32
    scf.if %44 {
      %c0_34 = arith.constant 0 : index
      %c0_35 = arith.constant 0 : index
      %45 = vector.load %arg25[%c0_34, %c0_35] : memref<16x32xf32, #tpu.memory_space<vmem>>, vector<16x32xf32>
      %c0_36 = arith.constant 0 : index
      %c0_37 = arith.constant 0 : index
      %46 = vector.load %arg26[%c0_36, %c0_37] : memref<16x32xf32, #tpu.memory_space<vmem>>, vector<16x32xf32>
      %47 = arith.addf %45, %46 : vector<16x32xf32>
      %c0_38 = arith.constant 0 : index
      %c0_39 = arith.constant 0 : index
      %48 = vector.load %arg7[%c0_38, %c0_39] : memref<16x2xf32, #tpu.memory_space<vmem>>, vector<16x2xf32>
      %49 = arith.mulf %47, %47 : vector<16x32xf32>
      %50 = tpu.concatenate %47, %49 in 1 : vector<16x32xf32>, vector<16x32xf32> -> vector<16x64xf32>
      %cst_40 = arith.constant dense<0.000000e+00> : vector<2x64xf32>
      %51 = tpu.matmul %48, %50, %cst_40 {dimension_numbers = #tpu.dot_dimension_numbers<[0], [0], [1], [1], [0, 1, 1, 1], [], []>} : vector<16x2xf32>, vector<16x64xf32>, vector<2x64xf32> -> vector<2x64xf32>
      %52 = vector.extract_strided_slice %51 {offsets = [0, 0], sizes = [2, 32], strides = [1, 1]} : vector<2x64xf32> to vector<2x32xf32>
      %53 = vector.extract_strided_slice %51 {offsets = [0, 32], sizes = [2, 32], strides = [1, 1]} : vector<2x64xf32> to vector<2x32xf32>
      %c0_41 = arith.constant 0 : index
      %c0_42 = arith.constant 0 : index
      %54 = vector.load %arg15[%c0_41, %c0_42] : memref<1x32xf32, #tpu.memory_space<vmem>>, vector<1x32xf32>
      %55 = vector.broadcast %54 : vector<1x32xf32> to vector<2x32xf32>
      %56 = arith.mulf %55, %52 : vector<2x32xf32>
      %cst_43 = arith.constant 2.000000e+00 : f32
      %57 = vector.broadcast %cst_43 : f32 to vector<2x32xf32>
      %58 = arith.mulf %57, %56 : vector<2x32xf32>
      %59 = arith.mulf %58, %52 : vector<2x32xf32>
      %60 = arith.subf %53, %59 : vector<2x32xf32>
      %61 = arith.mulf %56, %56 : vector<2x32xf32>
      %62 = arith.addf %60, %61 : vector<2x32xf32>
      %c0_44 = arith.constant 0 : index
      %c0_45 = arith.constant 0 : index
      %63 = vector.load %arg13[%c0_44, %c0_45] : memref<1x32xf32, #tpu.memory_space<vmem>>, vector<1x32xf32>
      %cst_46 = arith.constant 9.99999974E-6 : f32
      %64 = vector.broadcast %cst_46 : f32 to vector<2x32xf32>
      %65 = arith.addf %62, %64 : vector<2x32xf32>
      %66 = math.rsqrt %65 : vector<2x32xf32>
      %67 = vector.broadcast %63 : vector<1x32xf32> to vector<2x32xf32>
      %68 = arith.mulf %67, %66 : vector<2x32xf32>
      %c0_47 = arith.constant 0 : index
      %c0_48 = arith.constant 0 : index
      %69 = vector.load %arg6[%c0_47, %c0_48] : memref<16x2xf32, #tpu.memory_space<vmem>>, vector<16x2xf32>
      %70 = tpu.concatenate %56, %68 in 1 : vector<2x32xf32>, vector<2x32xf32> -> vector<2x64xf32>
      %cst_49 = arith.constant dense<0.000000e+00> : vector<16x64xf32>
      %71 = tpu.matmul %69, %70, %cst_49 {dimension_numbers = #tpu.dot_dimension_numbers<[1], [0], [0], [1], [0, 0, 1, 1], [], []>} : vector<16x2xf32>, vector<2x64xf32>, vector<16x64xf32> -> vector<16x64xf32>
      %72 = vector.extract_strided_slice %71 {offsets = [0, 0], sizes = [16, 32], strides = [1, 1]} : vector<16x64xf32> to vector<16x32xf32>
      %73 = arith.subf %47, %72 : vector<16x32xf32>
      %74 = vector.extract_strided_slice %71 {offsets = [0, 32], sizes = [16, 32], strides = [1, 1]} : vector<16x64xf32> to vector<16x32xf32>
      %75 = arith.mulf %73, %74 : vector<16x32xf32>
      %c0_50 = arith.constant 0 : index
      %c0_51 = arith.constant 0 : index
      %76 = vector.load %arg14[%c0_50, %c0_51] : memref<1x32xf32, #tpu.memory_space<vmem>>, vector<1x32xf32>
      %77 = vector.broadcast %76 : vector<1x32xf32> to vector<16x32xf32>
      %78 = arith.addf %75, %77 : vector<16x32xf32>
      %c0_52 = arith.constant 0 : index
      %c0_53 = arith.constant 0 : index
      %79 = vector.load %arg5[%c0_52, %c0_53] : memref<16x32xf32, #tpu.memory_space<vmem>>, vector<16x32xf32>
      %cst_54 = arith.constant 0.000000e+00 : f32
      %80 = vector.broadcast %cst_54 : f32 to vector<16x32xf32>
      %81 = arith.maximumf %78, %80 : vector<16x32xf32>
      %82 = arith.addf %79, %81 : vector<16x32xf32>
      %c0_55 = arith.constant 0 : index
      %c0_56 = arith.constant 0 : index
      %83 = vector.load %arg22[%c0_55, %c0_56] : memref<16x32xf32, #tpu.memory_space<vmem>>, vector<16x32xf32>
      tpu.vector_store %arg22[%c0_55, %c0_56], %82 {strides = array<i32>} : memref<16x32xf32, #tpu.memory_space<vmem>>, vector<16x32xf32>,
      %c0_57 = arith.constant 0 : index
      %c0_58 = arith.constant 0 : index
      %84 = vector.load %arg27[%c0_57, %c0_58] : memref<2x64xf32, #tpu.memory_space<vmem>>, vector<2x32xf32>
      %c0_59 = arith.constant 0 : index
      %c32 = arith.constant 32 : index
      %85 = vector.load %arg27[%c0_59, %c32] : memref<2x64xf32, #tpu.memory_space<vmem>>, vector<2x32xf32>
      %c0_60 = arith.constant 0 : index
      %c0_61 = arith.constant 0 : index
      %86 = vector.load %arg17[%c0_60, %c0_61] : memref<1x32xf32, #tpu.memory_space<vmem>>, vector<1x32xf32>
      %87 = vector.broadcast %86 : vector<1x32xf32> to vector<2x32xf32>
      %88 = arith.mulf %87, %84 : vector<2x32xf32>
      %cst_62 = arith.constant 2.000000e+00 : f32
      %89 = vector.broadcast %cst_62 : f32 to vector<2x32xf32>
      %90 = arith.mulf %89, %88 : vector<2x32xf32>
      %91 = arith.mulf %90, %84 : vector<2x32xf32>
      %92 = arith.subf %85, %91 : vector<2x32xf32>
      %93 = arith.mulf %88, %88 : vector<2x32xf32>
      %94 = arith.addf %92, %93 : vector<2x32xf32>
      %c0_63 = arith.constant 0 : index
      %c0_64 = arith.constant 0 : index
      %95 = vector.load %arg16[%c0_63, %c0_64] : memref<1x32xf32, #tpu.memory_space<vmem>>, vector<1x32xf32>
      %cst_65 = arith.constant 9.99999974E-6 : f32
      %96 = vector.broadcast %cst_65 : f32 to vector<2x32xf32>
      %97 = arith.addf %94, %96 : vector<2x32xf32>
      %98 = math.rsqrt %97 : vector<2x32xf32>
      %99 = vector.broadcast %95 : vector<1x32xf32> to vector<2x32xf32>
      %100 = arith.mulf %99, %98 : vector<2x32xf32>
      %c0_66 = arith.constant 0 : index
      %c0_67 = arith.constant 0 : index
      %101 = vector.load %arg8[%c0_66, %c0_67] : memref<2x16xf32, #tpu.memory_space<vmem>>, vector<2x16xf32>
      %cst_68 = arith.constant 0.000000e+00 : f32
      %102 = vector.broadcast %cst_68 : f32 to vector<2x16xf32>
      %103 = arith.maximumf %101, %102 : vector<2x16xf32>
      %c0_69 = arith.constant 0 : index
      %c0_70 = arith.constant 0 : index
      %104 = vector.load %arg18[%c0_69, %c0_70] : memref<16x32xf32, #tpu.memory_space<vmem>>, vector<16x32xf32>
      %cst_71 = arith.constant dense<0.000000e+00> : vector<2x32xf32>
      %105 = tpu.matmul %103, %104, %cst_71 {dimension_numbers = #tpu.dot_dimension_numbers<[1], [0], [0], [1], [0, 0, 1, 1], [], []>} : vector<2x16xf32>, vector<16x32xf32>, vector<2x32xf32> -> vector<2x32xf32>
      %c0_72 = arith.constant 0 : index
      %c0_73 = arith.constant 0 : index
      %106 = vector.load %arg19[%c0_72, %c0_73] : memref<1x32xf32, #tpu.memory_space<vmem>>, vector<1x32xf32>
      %107 = vector.broadcast %106 : vector<1x32xf32> to vector<2x32xf32>
      %108 = arith.addf %105, %107 : vector<2x32xf32>
      %109 = tpu.concatenate %88, %100, %108 in 1 : vector<2x32xf32>, vector<2x32xf32>, vector<2x32xf32> -> vector<2x96xf32>
      %c0_74 = arith.constant 0 : index
      %c0_75 = arith.constant 0 : index
      %110 = vector.load %arg23[%c0_74, %c0_75] : memref<2x96xf32, #tpu.memory_space<vmem>>, vector<2x96xf32>
      tpu.vector_store %arg23[%c0_74, %c0_75], %109 {strides = array<i32>} : memref<2x96xf32, #tpu.memory_space<vmem>>, vector<2x96xf32>,
    } else {
    }
    return
  }
  func.func @transform_0(%arg0: i32) -> (i32, i32) {
    %c0_i32 = arith.constant 0 : i32
    %c0_i32_0 = arith.constant 0 : i32
    return %arg0, %c0_i32 : i32, i32
  }
  func.func @transform_1(%arg0: i32) -> (i32, i32) {
    %c0_i32 = arith.constant 0 : i32
    %c0_i32_0 = arith.constant 0 : i32
    return %arg0, %c0_i32 : i32, i32
  }
  func.func @transform_2(%arg0: i32) -> (i32, i32) {
    %c0_i32 = arith.constant 0 : i32
    %c0_i32_0 = arith.constant 0 : i32
    return %arg0, %c0_i32 : i32, i32
  }
  func.func @transform_3(%arg0: i32) -> (i32, i32) {
    %c0_i32 = arith.constant 0 : i32
    %c0_i32_0 = arith.constant 0 : i32
    return %arg0, %c0_i32 : i32, i32
  }
  func.func @transform_4(%arg0: i32) -> (i32, i32) {
    %c0_i32 = arith.constant 0 : i32
    %c0_i32_0 = arith.constant 0 : i32
    %c0_i32_1 = arith.constant 0 : i32
    return %c0_i32, %c0_i32_0 : i32, i32
  }
  func.func @transform_5(%arg0: i32) -> (i32, i32) {
    %c0_i32 = arith.constant 0 : i32
    %c0_i32_0 = arith.constant 0 : i32
    %c0_i32_1 = arith.constant 0 : i32
    return %c0_i32, %c0_i32_0 : i32, i32
  }
  func.func @transform_6(%arg0: i32) -> (i32, i32) {
    %c0_i32 = arith.constant 0 : i32
    %c0_i32_0 = arith.constant 0 : i32
    %c0_i32_1 = arith.constant 0 : i32
    return %c0_i32, %c0_i32_0 : i32, i32
  }
  func.func @transform_7(%arg0: i32) -> (i32, i32) {
    %c0_i32 = arith.constant 0 : i32
    %c0_i32_0 = arith.constant 0 : i32
    %c0_i32_1 = arith.constant 0 : i32
    return %c0_i32, %c0_i32_0 : i32, i32
  }
  func.func @transform_8(%arg0: i32) -> (i32, i32) {
    %c0_i32 = arith.constant 0 : i32
    %c0_i32_0 = arith.constant 0 : i32
    %c0_i32_1 = arith.constant 0 : i32
    return %c0_i32, %c0_i32_0 : i32, i32
  }
  func.func @transform_9(%arg0: i32) -> (i32, i32) {
    %c0_i32 = arith.constant 0 : i32
    %c0_i32_0 = arith.constant 0 : i32
    %c0_i32_1 = arith.constant 0 : i32
    return %c0_i32, %c0_i32_0 : i32, i32
  }
  func.func @transform_10(%arg0: i32) -> (i32, i32) {
    %c0_i32 = arith.constant 0 : i32
    %c0_i32_0 = arith.constant 0 : i32
    %c0_i32_1 = arith.constant 0 : i32
    return %c0_i32, %c0_i32_0 : i32, i32
  }
  func.func @transform_11(%arg0: i32) -> (i32, i32) {
    %c0_i32 = arith.constant 0 : i32
    %c0_i32_0 = arith.constant 0 : i32
    %c0_i32_1 = arith.constant 0 : i32
    return %c0_i32, %c0_i32_0 : i32, i32
  }
  func.func @transform_12(%arg0: i32) -> (i32, i32) {
    %c0_i32 = arith.constant 0 : i32
    %c0_i32_0 = arith.constant 0 : i32
    %c0_i32_1 = arith.constant 0 : i32
    return %c0_i32, %c0_i32_0 : i32, i32
  }
  func.func @transform_13(%arg0: i32) -> (i32, i32) {
    %c0_i32 = arith.constant 0 : i32
    %c0_i32_0 = arith.constant 0 : i32
    %c0_i32_1 = arith.constant 0 : i32
    return %c0_i32, %c0_i32_0 : i32, i32
  }
  func.func @transform_14(%arg0: i32) -> (i32, i32) {
    %c0_i32 = arith.constant 0 : i32
    %c0_i32_0 = arith.constant 0 : i32
    %c0_i32_1 = arith.constant 0 : i32
    return %c0_i32, %c0_i32_0 : i32, i32
  }
  func.func @transform_15(%arg0: i32) -> (i32, i32) {
    %c0_i32 = arith.constant 0 : i32
    %c0_i32_0 = arith.constant 0 : i32
    %c0_i32_1 = arith.constant 0 : i32
    return %c0_i32, %c0_i32_0 : i32, i32
  }
  func.func @transform_16(%arg0: i32) -> (i32, i32) {
    %c0_i32 = arith.constant 0 : i32
    %c0_i32_0 = arith.constant 0 : i32
    %c0_i32_1 = arith.constant 0 : i32
    return %c0_i32, %c0_i32_0 : i32, i32
  }
  func.func @transform_17(%arg0: i32) -> (i32, i32) {
    %c0_i32 = arith.constant 0 : i32
    %c0_i32_0 = arith.constant 0 : i32
    %c0_i32_1 = arith.constant 0 : i32
    return %c0_i32, %c0_i32_0 : i32, i32
  }
  func.func @transform_18(%arg0: i32) -> (i32, i32) {
    %c0_i32 = arith.constant 0 : i32
    %c0_i32_0 = arith.constant 0 : i32
    %c0_i32_1 = arith.constant 0 : i32
    return %c0_i32, %c0_i32_0 : i32, i32
  }
  func.func @transform_19(%arg0: i32) -> (i32, i32) {
    %c0_i32 = arith.constant 0 : i32
    %c0_i32_0 = arith.constant 0 : i32
    return %arg0, %c0_i32 : i32, i32
  }
  func.func @transform_20(%arg0: i32) -> (i32, i32) {
    %c0_i32 = arith.constant 0 : i32
    %c0_i32_0 = arith.constant 0 : i32
    return %arg0, %c0_i32 : i32, i32
  }
  func.func @transform_21(%arg0: i32) -> (i32, i32) {
    %c0_i32 = arith.constant 0 : i32
    %c0_i32_0 = arith.constant 0 : i32
    %c0_i32_1 = arith.constant 0 : i32
    return %c0_i32, %c0_i32_0 : i32, i32
  }
  func.func @transform_22(%arg0: i32) -> (i32, i32) {
    %c0_i32 = arith.constant 0 : i32
    %c0_i32_0 = arith.constant 0 : i32
    %c0_i32_1 = arith.constant 0 : i32
    return %c0_i32, %c0_i32_0 : i32, i32
  }
}

</mosaic_0001>

<llo_original>
// kernel: tpu_custom_call.1
$region0: #{tpu_custom_call.1}
  #allocation0 [shape = 'u32[]', space=smem, size = 0x4, offset = 0x4, fixed_abs, tag = 'smem constant byte address 0x4 - core index']
  #allocation1 [shape = 'u32[144,128]{1,0:T(1,128)}', space=vmem, size = 0x12000, scoped, tag = 'internal scratch']
  #allocation2 [shape = 'bf16[16,128]{1,0:T(16,128)(2,1)}', space=vmem, size = 0x1000, scoped, tag = 'scratch operand']
  #allocation3 [shape = 'f32[16,32]{1,0:T(8,128)}', space=vmem, size = 0x2000, scoped, tag = 'scratch operand']
  #allocation4 [shape = 'f32[16,32]{1,0:T(8,128)}', space=vmem, size = 0x2000, scoped, tag = 'scratch operand']
  #allocation5 [shape = 'f32[2,64]{1,0:T(2,128)}', space=vmem, size = 0x400, scoped, tag = 'scratch operand']
  %s0 = inlined_call_operand.vmem [shape: f32[32,8], index: 0, kind: input, shape index: {}]
  %s1 = inlined_call_operand.vmem [shape: bf16[32,16], index: 1, kind: input, shape index: {}]
  %s2 = inlined_call_operand.vmem [shape: bf16[32,16], index: 2, kind: input, shape index: {}]
  %s3 = inlined_call_operand.vmem [shape: f32[32,2], index: 3, kind: input, shape index: {}]
  %s4 = inlined_call_operand.vmem [shape: f32[16,32], index: 4, kind: input, shape index: {}]
  %s5 = inlined_call_operand.vmem [shape: f32[16,2], index: 5, kind: input, shape index: {}]
  %s6 = inlined_call_operand.vmem [shape: f32[16,2], index: 6, kind: input, shape index: {}]
  %s7 = inlined_call_operand.vmem [shape: f32[2,16], index: 7, kind: input, shape index: {}]
  %s8 = inlined_call_operand.vmem [shape: f32[8,64], index: 8, kind: input, shape index: {}]
  %s9 = inlined_call_operand.vmem [shape: f32[1,64], index: 9, kind: input, shape index: {}]
  %s10 = inlined_call_operand.vmem [shape: f32[32,128], index: 10, kind: input, shape index: {}]
  %s11 = inlined_call_operand.vmem [shape: f32[1,128], index: 11, kind: input, shape index: {}]
  %s12 = inlined_call_operand.vmem [shape: f32[1,32], index: 12, kind: input, shape index: {}]
  %s13 = inlined_call_operand.vmem [shape: f32[1,32], index: 13, kind: input, shape index: {}]
  %s14 = inlined_call_operand.vmem [shape: f32[1,32], index: 14, kind: input, shape index: {}]
  %s15 = inlined_call_operand.vmem [shape: f32[1,32], index: 15, kind: input, shape index: {}]
  %s16 = inlined_call_operand.vmem [shape: f32[1,32], index: 16, kind: input, shape index: {}]
  %s17 = inlined_call_operand.vmem [shape: f32[16,32], index: 17, kind: input, shape index: {}]
  %s18 = inlined_call_operand.vmem [shape: f32[1,32], index: 18, kind: input, shape index: {}]
  %s19 = inlined_call_operand.hbm [shape: f32[32,32], index: 19, kind: output, shape index: {0}]
  %s20 = inlined_call_operand.hbm [shape: f32[32,32], index: 20, kind: output, shape index: {1}]
  %s21 = inlined_call_operand.hbm [shape: f32[16,32], index: 21, kind: output, shape index: {2}]
  %s22 = inlined_call_operand.hbm [shape: f32[2,96], index: 22, kind: output, shape index: {3}]
  %23 = xla_tuple %s19, %s20, %s21, %s22
  %s24 = sld [smem:[#allocation0]]
  $region141: #{tpu_custom_call.1} parent=0
    _
  %s26 = ssub.s32 1, %s24
  %s27 = scalar_select 0, %s26, %s24
  $region1: #{tpu_custom_call.1} parent=0
    #allocation6 [shape = 'u8[16384]{0}', space=vmem, size = 0x4000, scoped, tag = 'output window, operand 0']
    #allocation7 [shape = 's32[2]{0}', space=sflag, size = 0x8, scoped, tag = 'scoped memory for tpu_custom_call.1']
    #allocation8 [shape = 'u8[16384]{0}', space=vmem, size = 0x4000, scoped, tag = 'output window, operand 1']
    #allocation9 [shape = 's32[2]{0}', space=sflag, size = 0x8, scoped, tag = 'scoped memory for tpu_custom_call.1']
    #allocation10 [shape = 'u8[8192]{0}', space=vmem, size = 0x2000, scoped, tag = 'output window, operand 2, single buffered']
    #allocation11 [shape = 'u8[1024]{0}', space=vmem, size = 0x400, scoped, tag = 'output window, operand 3, single buffered']
    #allocation12 [shape = 's32[1]{0}', space=sflag, size = 0x4, scoped, tag = 'scoped memory for tpu_custom_call.1']
    %28 = vsyncpa [#allocation7], 0
    %s29 = scalar_lea.sflag [#allocation7], 1
    %30 = vsyncpa %s29, 0
    %31 = vsyncpa [#allocation9], 0
    %s32 = scalar_lea.sflag [#allocation9], 1
    %33 = vsyncpa %s32, 0
    %34 = vsyncpa [#allocation12], 0
    loop: start=0, step=1, limit=4
    $region2: #{tpu_custom_call.1} parent=1 // loop_pre_header
      _
    $region3: #{tpu_custom_call.1} parent=1 // loop_header
      %s36 = sphi 0, %s40
      %p37 = scmp.ge.s32.totalorder %s36, 4
      %s46 = sphi 0, %s48
      %s49 = sphi 0, %s46
      %s50 = sphi 0, %s49
      %s66 = sphi 0, %s50
      %s72 = sphi 0, %s74
      %s75 = sphi 0, %s72
      %s76 = sphi 0, %s75
      %s92 = sphi 0, %s76
      %s98 = sphi 0, %s100
      %s101 = sphi 0, %s98
      %s102 = sphi 0, %s101
      %s118 = sphi 0, %s102
      %s124 = sphi 0, %s126
      %s127 = sphi 0, %s124
      %s128 = sphi 0, %s127
      %s144 = sphi 0, %s128
      %s148 = sphi 0, %s148
      %s150 = sphi 0, %s148
      %s151 = sphi 0, %s150
      %s165 = sphi 0, %s151
      %s169 = sphi 0, %s169
      %s171 = sphi 0, %s169
      %s172 = sphi 0, %s171
      %s186 = sphi 0, %s172
      %s190 = sphi 0, %s190
      %s192 = sphi 0, %s190
      %s193 = sphi 0, %s192
      %s207 = sphi 0, %s193
      %s211 = sphi 0, %s211
      %s213 = sphi 0, %s211
      %s214 = sphi 0, %s213
      %s228 = sphi 0, %s214
      %s232 = sphi 0, %s232
      %s234 = sphi 0, %s232
      %s235 = sphi 0, %s234
      %s249 = sphi 0, %s235
      %s253 = sphi 0, %s253
      %s255 = sphi 0, %s253
      %s256 = sphi 0, %s255
      %s270 = sphi 0, %s256
      %s274 = sphi 0, %s274
      %s276 = sphi 0, %s274
      %s277 = sphi 0, %s276
      %s291 = sphi 0, %s277
      %s295 = sphi 0, %s295
      %s297 = sphi 0, %s295
      %s298 = sphi 0, %s297
      %s312 = sphi 0, %s298
      %s316 = sphi 0, %s316
      %s318 = sphi 0, %s316
      %s319 = sphi 0, %s318
      %s333 = sphi 0, %s319
      %s337 = sphi 0, %s337
      %s339 = sphi 0, %s337
      %s340 = sphi 0, %s339
      %s354 = sphi 0, %s340
      %s358 = sphi 0, %s358
      %s360 = sphi 0, %s358
      %s361 = sphi 0, %s360
      %s375 = sphi 0, %s361
      %s379 = sphi 0, %s379
      %s381 = sphi 0, %s379
      %s382 = sphi 0, %s381
      %s396 = sphi 0, %s382
      %s400 = sphi 0, %s400
      %s402 = sphi 0, %s400
      %s403 = sphi 0, %s402
      %s417 = sphi 0, %s403
      %s421 = sphi 0, %s421
      %s423 = sphi 0, %s421
      %s424 = sphi 0, %s423
      %s438 = sphi 0, %s424
      %s442 = sphi 0, %s442
      %s444 = sphi 0, %s442
      %s445 = sphi 0, %s444
      %s459 = sphi 0, %s445
      %s465 = sphi 0, %s467
      %s468 = sphi 0, %s465
      %s469 = sphi 0, %s468
      %s485 = sphi 0, %s469
      %s491 = sphi 0, %s493
      %s494 = sphi 0, %s491
      %s495 = sphi 0, %s494
      %s511 = sphi 0, %s495
      %s515 = sphi 0, %s515
      %s517 = sphi 0, %s515
      %s518 = sphi 0, %s517
      %s532 = sphi 0, %s518
      %s536 = sphi 0, %s536
      %s538 = sphi 0, %s536
      %s539 = sphi 0, %s538
      %s553 = sphi 0, %s539
    $region4: #{tpu_custom_call.1} parent=1 // loop_header_branch
      %39 = sbr.rel (%p37) target = $region8
    $region5: #{tpu_custom_call.1} parent=1 // loop_body
      %s41 = ssub.s32 %s36, 1
      %s42 = ssub.s32 %s36, 2
      %s43 = sadd.s32 %s36, 1
      %s44 = ssub.s32 %s36, %s43
      %p45 = scmp.eq.s32.totalorder %s44, 0
      %s47 = sadd.s32 %s46, 1
      %s48 = scalar_select %p45, %s46, %s47
      %p51 = pneg %p45
      %p52 = scmp.eq.s32.totalorder %s36, 1
      %p53 = por %p51, %p52
      %p54 = scmp.ne.s32.totalorder %s46, %s49
      %p55 = scmp.eq.s32.totalorder %s36, 0
      %p56 = por %p54, %p55
      %p57 = scmp.ne.s32.totalorder %s46, %s49
      %p58 = scmp.eq.s32.totalorder %s41, 1
      %p59 = por %p57, %p58
      %p60 = scmp.ne.s32.totalorder %s49, %s50
      %p61 = scmp.eq.s32.totalorder %s41, 0
      %p62 = por %p60, %p61
      %p63 = scmp.ne.s32.totalorder %s49, %s50
      %p64 = scmp.eq.s32.totalorder %s42, 1
      %p65 = por %p63, %p64
      %p67 = scmp.ne.s32.totalorder %s50, %s66
      %p68 = scmp.eq.s32.totalorder %s42, 0
      %p69 = por %p67, %p68
      %s70 = ssub.s32 %s36, %s43
      %p71 = scmp.eq.s32.totalorder %s70, 0
      %s73 = sadd.s32 %s72, 1
      %s74 = scalar_select %p71, %s72, %s73
      %p77 = pneg %p71
      %p78 = scmp.eq.s32.totalorder %s36, 1
      %p79 = por %p77, %p78
      %p80 = scmp.ne.s32.totalorder %s72, %s75
      %p81 = scmp.eq.s32.totalorder %s36, 0
      %p82 = por %p80, %p81
      %p83 = scmp.ne.s32.totalorder %s72, %s75
      %p84 = scmp.eq.s32.totalorder %s41, 1
      %p85 = por %p83, %p84
      %p86 = scmp.ne.s32.totalorder %s75, %s76
      %p87 = scmp.eq.s32.totalorder %s41, 0
      %p88 = por %p86, %p87
      %p89 = scmp.ne.s32.totalorder %s75, %s76
      %p90 = scmp.eq.s32.totalorder %s42, 1
      %p91 = por %p89, %p90
      %p93 = scmp.ne.s32.totalorder %s76, %s92
      %p94 = scmp.eq.s32.totalorder %s42, 0
      %p95 = por %p93, %p94
      %s96 = ssub.s32 %s36, %s43
      %p97 = scmp.eq.s32.totalorder %s96, 0
      %s99 = sadd.s32 %s98, 1
      %s100 = scalar_select %p97, %s98, %s99
      %p103 = pneg %p97
      %p104 = scmp.eq.s32.totalorder %s36, 1
      %p105 = por %p103, %p104
      %p106 = scmp.ne.s32.totalorder %s98, %s101
      %p107 = scmp.eq.s32.totalorder %s36, 0
      %p108 = por %p106, %p107
      %p109 = scmp.ne.s32.totalorder %s98, %s101
      %p110 = scmp.eq.s32.totalorder %s41, 1
      %p111 = por %p109, %p110
      %p112 = scmp.ne.s32.totalorder %s101, %s102
      %p113 = scmp.eq.s32.totalorder %s41, 0
      %p114 = por %p112, %p113
      %p115 = scmp.ne.s32.totalorder %s101, %s102
      %p116 = scmp.eq.s32.totalorder %s42, 1
      %p117 = por %p115, %p116
      %p119 = scmp.ne.s32.totalorder %s102, %s118
      %p120 = scmp.eq.s32.totalorder %s42, 0
      %p121 = por %p119, %p120
      %s122 = ssub.s32 %s36, %s43
      %p123 = scmp.eq.s32.totalorder %s122, 0
      %s125 = sadd.s32 %s124, 1
      %s126 = scalar_select %p123, %s124, %s125
      %p129 = pneg %p123
      %p130 = scmp.eq.s32.totalorder %s36, 1
      %p131 = por %p129, %p130
      %p132 = scmp.ne.s32.totalorder %s124, %s127
      %p133 = scmp.eq.s32.totalorder %s36, 0
      %p134 = por %p132, %p133
      %p135 = scmp.ne.s32.totalorder %s124, %s127
      %p136 = scmp.eq.s32.totalorder %s41, 1
      %p137 = por %p135, %p136
      %p138 = scmp.ne.s32.totalorder %s127, %s128
      %p139 = scmp.eq.s32.totalorder %s41, 0
      %p140 = por %p138, %p139
      %p141 = scmp.ne.s32.totalorder %s127, %s128
      %p142 = scmp.eq.s32.totalorder %s42, 1
      %p143 = por %p141, %p142
      %p145 = scmp.ne.s32.totalorder %s128, %s144
      %p146 = scmp.eq.s32.totalorder %s42, 0
      %p147 = por %p145, %p146
      %s149 = sadd.s32 %s148, 1
      %p152 = scmp.eq.s32.totalorder %s36, 1
      %p153 = scmp.ne.s32.totalorder %s148, %s150
      %p154 = scmp.eq.s32.totalorder %s36, 0
      %p155 = por %p153, %p154
      %p156 = scmp.ne.s32.totalorder %s148, %s150
      %p157 = scmp.eq.s32.totalorder %s41, 1
      %p158 = por %p156, %p157
      %p159 = scmp.ne.s32.totalorder %s150, %s151
      %p160 = scmp.eq.s32.totalorder %s41, 0
      %p161 = por %p159, %p160
      %p162 = scmp.ne.s32.totalorder %s150, %s151
      %p163 = scmp.eq.s32.totalorder %s42, 1
      %p164 = por %p162, %p163
      %p166 = scmp.ne.s32.totalorder %s151, %s165
      %p167 = scmp.eq.s32.totalorder %s42, 0
      %p168 = por %p166, %p167
      %s170 = sadd.s32 %s169, 1
      %p173 = scmp.eq.s32.totalorder %s36, 1
      %p174 = scmp.ne.s32.totalorder %s169, %s171
      %p175 = scmp.eq.s32.totalorder %s36, 0
      %p176 = por %p174, %p175
      %p177 = scmp.ne.s32.totalorder %s169, %s171
      %p178 = scmp.eq.s32.totalorder %s41, 1
      %p179 = por %p177, %p178
      %p180 = scmp.ne.s32.totalorder %s171, %s172
      %p181 = scmp.eq.s32.totalorder %s41, 0
      %p182 = por %p180, %p181
      %p183 = scmp.ne.s32.totalorder %s171, %s172
      %p184 = scmp.eq.s32.totalorder %s42, 1
      %p185 = por %p183, %p184
      %p187 = scmp.ne.s32.totalorder %s172, %s186
      %p188 = scmp.eq.s32.totalorder %s42, 0
      %p189 = por %p187, %p188
      %s191 = sadd.s32 %s190, 1
      %p194 = scmp.eq.s32.totalorder %s36, 1
      %p195 = scmp.ne.s32.totalorder %s190, %s192
      %p196 = scmp.eq.s32.totalorder %s36, 0
      %p197 = por %p195, %p196
      %p198 = scmp.ne.s32.totalorder %s190, %s192
      %p199 = scmp.eq.s32.totalorder %s41, 1
      %p200 = por %p198, %p199
      %p201 = scmp.ne.s32.totalorder %s192, %s193
      %p202 = scmp.eq.s32.totalorder %s41, 0
      %p203 = por %p201, %p202
      %p204 = scmp.ne.s32.totalorder %s192, %s193
      %p205 = scmp.eq.s32.totalorder %s42, 1
      %p206 = por %p204, %p205
      %p208 = scmp.ne.s32.totalorder %s193, %s207
      %p209 = scmp.eq.s32.totalorder %s42, 0
      %p210 = por %p208, %p209
      %s212 = sadd.s32 %s211, 1
      %p215 = scmp.eq.s32.totalorder %s36, 1
      %p216 = scmp.ne.s32.totalorder %s211, %s213
      %p217 = scmp.eq.s32.totalorder %s36, 0
      %p218 = por %p216, %p217
      %p219 = scmp.ne.s32.totalorder %s211, %s213
      %p220 = scmp.eq.s32.totalorder %s41, 1
      %p221 = por %p219, %p220
      %p222 = scmp.ne.s32.totalorder %s213, %s214
      %p223 = scmp.eq.s32.totalorder %s41, 0
      %p224 = por %p222, %p223
      %p225 = scmp.ne.s32.totalorder %s213, %s214
      %p226 = scmp.eq.s32.totalorder %s42, 1
      %p227 = por %p225, %p226
      %p229 = scmp.ne.s32.totalorder %s214, %s228
      %p230 = scmp.eq.s32.totalorder %s42, 0
      %p231 = por %p229, %p230
      %s233 = sadd.s32 %s232, 1
      %p236 = scmp.eq.s32.totalorder %s36, 1
      %p237 = scmp.ne.s32.totalorder %s232, %s234
      %p238 = scmp.eq.s32.totalorder %s36, 0
      %p239 = por %p237, %p238
      %p240 = scmp.ne.s32.totalorder %s232, %s234
      %p241 = scmp.eq.s32.totalorder %s41, 1
      %p242 = por %p240, %p241
      %p243 = scmp.ne.s32.totalorder %s234, %s235
      %p244 = scmp.eq.s32.totalorder %s41, 0
      %p245 = por %p243, %p244
      %p246 = scmp.ne.s32.totalorder %s234, %s235
      %p247 = scmp.eq.s32.totalorder %s42, 1
      %p248 = por %p246, %p247
      %p250 = scmp.ne.s32.totalorder %s235, %s249
      %p251 = scmp.eq.s32.totalorder %s42, 0
      %p252 = por %p250, %p251
      %s254 = sadd.s32 %s253, 1
      %p257 = scmp.eq.s32.totalorder %s36, 1
      %p258 = scmp.ne.s32.totalorder %s253, %s255
      %p259 = scmp.eq.s32.totalorder %s36, 0
      %p260 = por %p258, %p259
      %p261 = scmp.ne.s32.totalorder %s253, %s255
      %p262 = scmp.eq.s32.totalorder %s41, 1
      %p263 = por %p261, %p262
      %p264 = scmp.ne.s32.totalorder %s255, %s256
      %p265 = scmp.eq.s32.totalorder %s41, 0
      %p266 = por %p264, %p265
      %p267 = scmp.ne.s32.totalorder %s255, %s256
      %p268 = scmp.eq.s32.totalorder %s42, 1
      %p269 = por %p267, %p268
      %p271 = scmp.ne.s32.totalorder %s256, %s270
      %p272 = scmp.eq.s32.totalorder %s42, 0
      %p273 = por %p271, %p272
      %s275 = sadd.s32 %s274, 1
      %p278 = scmp.eq.s32.totalorder %s36, 1
      %p279 = scmp.ne.s32.totalorder %s274, %s276
      %p280 = scmp.eq.s32.totalorder %s36, 0
      %p281 = por %p279, %p280
      %p282 = scmp.ne.s32.totalorder %s274, %s276
      %p283 = scmp.eq.s32.totalorder %s41, 1
      %p284 = por %p282, %p283
      %p285 = scmp.ne.s32.totalorder %s276, %s277
      %p286 = scmp.eq.s32.totalorder %s41, 0
      %p287 = por %p285, %p286
      %p288 = scmp.ne.s32.totalorder %s276, %s277
      %p289 = scmp.eq.s32.totalorder %s42, 1
      %p290 = por %p288, %p289
      %p292 = scmp.ne.s32.totalorder %s277, %s291
      %p293 = scmp.eq.s32.totalorder %s42, 0
      %p294 = por %p292, %p293
      %s296 = sadd.s32 %s295, 1
      %p299 = scmp.eq.s32.totalorder %s36, 1
      %p300 = scmp.ne.s32.totalorder %s295, %s297
      %p301 = scmp.eq.s32.totalorder %s36, 0
      %p302 = por %p300, %p301
      %p303 = scmp.ne.s32.totalorder %s295, %s297
      %p304 = scmp.eq.s32.totalorder %s41, 1
      %p305 = por %p303, %p304
      %p306 = scmp.ne.s32.totalorder %s297, %s298
      %p307 = scmp.eq.s32.totalorder %s41, 0
      %p308 = por %p306, %p307
      %p309 = scmp.ne.s32.totalorder %s297, %s298
      %p310 = scmp.eq.s32.totalorder %s42, 1
      %p311 = por %p309, %p310
      %p313 = scmp.ne.s32.totalorder %s298, %s312
      %p314 = scmp.eq.s32.totalorder %s42, 0
      %p315 = por %p313, %p314
      %s317 = sadd.s32 %s316, 1
      %p320 = scmp.eq.s32.totalorder %s36, 1
      %p321 = scmp.ne.s32.totalorder %s316, %s318
      %p322 = scmp.eq.s32.totalorder %s36, 0
      %p323 = por %p321, %p322
      %p324 = scmp.ne.s32.totalorder %s316, %s318
      %p325 = scmp.eq.s32.totalorder %s41, 1
      %p326 = por %p324, %p325
      %p327 = scmp.ne.s32.totalorder %s318, %s319
      %p328 = scmp.eq.s32.totalorder %s41, 0
      %p329 = por %p327, %p328
      %p330 = scmp.ne.s32.totalorder %s318, %s319
      %p331 = scmp.eq.s32.totalorder %s42, 1
      %p332 = por %p330, %p331
      %p334 = scmp.ne.s32.totalorder %s319, %s333
      %p335 = scmp.eq.s32.totalorder %s42, 0
      %p336 = por %p334, %p335
      %s338 = sadd.s32 %s337, 1
      %p341 = scmp.eq.s32.totalorder %s36, 1
      %p342 = scmp.ne.s32.totalorder %s337, %s339
      %p343 = scmp.eq.s32.totalorder %s36, 0
      %p344 = por %p342, %p343
      %p345 = scmp.ne.s32.totalorder %s337, %s339
      %p346 = scmp.eq.s32.totalorder %s41, 1
      %p347 = por %p345, %p346
      %p348 = scmp.ne.s32.totalorder %s339, %s340
      %p349 = scmp.eq.s32.totalorder %s41, 0
      %p350 = por %p348, %p349
      %p351 = scmp.ne.s32.totalorder %s339, %s340
      %p352 = scmp.eq.s32.totalorder %s42, 1
      %p353 = por %p351, %p352
      %p355 = scmp.ne.s32.totalorder %s340, %s354
      %p356 = scmp.eq.s32.totalorder %s42, 0
      %p357 = por %p355, %p356
      %s359 = sadd.s32 %s358, 1
      %p362 = scmp.eq.s32.totalorder %s36, 1
      %p363 = scmp.ne.s32.totalorder %s358, %s360
      %p364 = scmp.eq.s32.totalorder %s36, 0
      %p365 = por %p363, %p364
      %p366 = scmp.ne.s32.totalorder %s358, %s360
      %p367 = scmp.eq.s32.totalorder %s41, 1
      %p368 = por %p366, %p367
      %p369 = scmp.ne.s32.totalorder %s360, %s361
      %p370 = scmp.eq.s32.totalorder %s41, 0
      %p371 = por %p369, %p370
      %p372 = scmp.ne.s32.totalorder %s360, %s361
      %p373 = scmp.eq.s32.totalorder %s42, 1
      %p374 = por %p372, %p373
      %p376 = scmp.ne.s32.totalorder %s361, %s375
      %p377 = scmp.eq.s32.totalorder %s42, 0
      %p378 = por %p376, %p377
      %s380 = sadd.s32 %s379, 1
      %p383 = scmp.eq.s32.totalorder %s36, 1
      %p384 = scmp.ne.s32.totalorder %s379, %s381
      %p385 = scmp.eq.s32.totalorder %s36, 0
      %p386 = por %p384, %p385
      %p387 = scmp.ne.s32.totalorder %s379, %s381
      %p388 = scmp.eq.s32.totalorder %s41, 1
      %p389 = por %p387, %p388
      %p390 = scmp.ne.s32.totalorder %s381, %s382
      %p391 = scmp.eq.s32.totalorder %s41, 0
      %p392 = por %p390, %p391
      %p393 = scmp.ne.s32.totalorder %s381, %s382
      %p394 = scmp.eq.s32.totalorder %s42, 1
      %p395 = por %p393, %p394
      %p397 = scmp.ne.s32.totalorder %s382, %s396
      %p398 = scmp.eq.s32.totalorder %s42, 0
      %p399 = por %p397, %p398
      %s401 = sadd.s32 %s400, 1
      %p404 = scmp.eq.s32.totalorder %s36, 1
      %p405 = scmp.ne.s32.totalorder %s400, %s402
      %p406 = scmp.eq.s32.totalorder %s36, 0
      %p407 = por %p405, %p406
      %p408 = scmp.ne.s32.totalorder %s400, %s402
      %p409 = scmp.eq.s32.totalorder %s41, 1
      %p410 = por %p408, %p409
      %p411 = scmp.ne.s32.totalorder %s402, %s403
      %p412 = scmp.eq.s32.totalorder %s41, 0
      %p413 = por %p411, %p412
      %p414 = scmp.ne.s32.totalorder %s402, %s403
      %p415 = scmp.eq.s32.totalorder %s42, 1
      %p416 = por %p414, %p415
      %p418 = scmp.ne.s32.totalorder %s403, %s417
      %p419 = scmp.eq.s32.totalorder %s42, 0
      %p420 = por %p418, %p419
      %s422 = sadd.s32 %s421, 1
      %p425 = scmp.eq.s32.totalorder %s36, 1
      %p426 = scmp.ne.s32.totalorder %s421, %s423
      %p427 = scmp.eq.s32.totalorder %s36, 0
      %p428 = por %p426, %p427
      %p429 = scmp.ne.s32.totalorder %s421, %s423
      %p430 = scmp.eq.s32.totalorder %s41, 1
      %p431 = por %p429, %p430
      %p432 = scmp.ne.s32.totalorder %s423, %s424
      %p433 = scmp.eq.s32.totalorder %s41, 0
      %p434 = por %p432, %p433
      %p435 = scmp.ne.s32.totalorder %s423, %s424
      %p436 = scmp.eq.s32.totalorder %s42, 1
      %p437 = por %p435, %p436
      %p439 = scmp.ne.s32.totalorder %s424, %s438
      %p440 = scmp.eq.s32.totalorder %s42, 0
      %p441 = por %p439, %p440
      %s443 = sadd.s32 %s442, 1
      %p446 = scmp.eq.s32.totalorder %s36, 1
      %p447 = scmp.ne.s32.totalorder %s442, %s444
      %p448 = scmp.eq.s32.totalorder %s36, 0
      %p449 = por %p447, %p448
      %p450 = scmp.ne.s32.totalorder %s442, %s444
      %p451 = scmp.eq.s32.totalorder %s41, 1
      %p452 = por %p450, %p451
      %p453 = scmp.ne.s32.totalorder %s444, %s445
      %p454 = scmp.eq.s32.totalorder %s41, 0
      %p455 = por %p453, %p454
      %p456 = scmp.ne.s32.totalorder %s444, %s445
      %p457 = scmp.eq.s32.totalorder %s42, 1
      %p458 = por %p456, %p457
      %p460 = scmp.ne.s32.totalorder %s445, %s459
      %p461 = scmp.eq.s32.totalorder %s42, 0
      %p462 = por %p460, %p461
      %s463 = ssub.s32 %s36, %s43
      %p464 = scmp.eq.s32.totalorder %s463, 0
      %s466 = sadd.s32 %s465, 1
      %s467 = scalar_select %p464, %s465, %s466
      %p470 = pneg %p464
      %p471 = scmp.eq.s32.totalorder %s36, 1
      %p472 = por %p470, %p471
      %p473 = scmp.ne.s32.totalorder %s465, %s468
      %p474 = scmp.eq.s32.totalorder %s36, 0
      %p475 = por %p473, %p474
      %p476 = scmp.ne.s32.totalorder %s465, %s468
      %p477 = scmp.eq.s32.totalorder %s41, 1
      %p478 = por %p476, %p477
      %p479 = scmp.ne.s32.totalorder %s468, %s469
      %p480 = scmp.eq.s32.totalorder %s41, 0
      %p481 = por %p479, %p480
      %p482 = scmp.ne.s32.totalorder %s468, %s469
      %p483 = scmp.eq.s32.totalorder %s42, 1
      %p484 = por %p482, %p483
      %p486 = scmp.ne.s32.totalorder %s469, %s485
      %p487 = scmp.eq.s32.totalorder %s42, 0
      %p488 = por %p486, %p487
      %s489 = ssub.s32 %s36, %s43
      %p490 = scmp.eq.s32.totalorder %s489, 0
      %s492 = sadd.s32 %s491, 1
      %s493 = scalar_select %p490, %s491, %s492
      %p496 = pneg %p490
      %p497 = scmp.eq.s32.totalorder %s36, 1
      %p498 = por %p496, %p497
      %p499 = scmp.ne.s32.totalorder %s491, %s494
      %p500 = scmp.eq.s32.totalorder %s36, 0
      %p501 = por %p499, %p500
      %p502 = scmp.ne.s32.totalorder %s491, %s494
      %p503 = scmp.eq.s32.totalorder %s41, 1
      %p504 = por %p502, %p503
      %p505 = scmp.ne.s32.totalorder %s494, %s495
      %p506 = scmp.eq.s32.totalorder %s41, 0
      %p507 = por %p505, %p506
      %p508 = scmp.ne.s32.totalorder %s494, %s495
      %p509 = scmp.eq.s32.totalorder %s42, 1
      %p510 = por %p508, %p509
      %p512 = scmp.ne.s32.totalorder %s495, %s511
      %p513 = scmp.eq.s32.totalorder %s42, 0
      %p514 = por %p512, %p513
      %s516 = sadd.s32 %s515, 1
      %p519 = scmp.eq.s32.totalorder %s36, 1
      %p520 = scmp.ne.s32.totalorder %s515, %s517
      %p521 = scmp.eq.s32.totalorder %s36, 0
      %p522 = por %p520, %p521
      %p523 = scmp.ne.s32.totalorder %s515, %s517
      %p524 = scmp.eq.s32.totalorder %s41, 1
      %p525 = por %p523, %p524
      %p526 = scmp.ne.s32.totalorder %s517, %s518
      %p527 = scmp.eq.s32.totalorder %s41, 0
      %p528 = por %p526, %p527
      %p529 = scmp.ne.s32.totalorder %s517, %s518
      %p530 = scmp.eq.s32.totalorder %s42, 1
      %p531 = por %p529, %p530
      %p533 = scmp.ne.s32.totalorder %s518, %s532
      %p534 = scmp.eq.s32.totalorder %s42, 0
      %p535 = por %p533, %p534
      %s537 = sadd.s32 %s536, 1
      %p540 = scmp.eq.s32.totalorder %s36, 1
      %p541 = scmp.ne.s32.totalorder %s536, %s538
      %p542 = scmp.eq.s32.totalorder %s36, 0
      %p543 = por %p541, %p542
      %p544 = scmp.ne.s32.totalorder %s536, %s538
      %p545 = scmp.eq.s32.totalorder %s41, 1
      %p546 = por %p544, %p545
      %p547 = scmp.ne.s32.totalorder %s538, %s539
      %p548 = scmp.eq.s32.totalorder %s41, 0
      %p549 = por %p547, %p548
      %p550 = scmp.ne.s32.totalorder %s538, %s539
      %p551 = scmp.eq.s32.totalorder %s42, 1
      %p552 = por %p550, %p551
      %p554 = scmp.ne.s32.totalorder %s539, %s553
      %p555 = scmp.eq.s32.totalorder %s42, 0
      %p556 = por %p554, %p555
      %p557 = scmp.le.s32.totalorder 1, %s36
      %p558 = scmp.lt.s32.totalorder %s36, 3
      %p559 = pnand %p557, %p558
      %p560 = pneg %p559
      // Predicated region
      $region9: #{tpu_custom_call.1} parent=5 // pred_check
        _
      $region10: #{tpu_custom_call.1} parent=5 // pred_check_branch
        %562 = sbr.rel (%p559) target = $region12
      $region11: #{tpu_custom_call.1} parent=5 // pred_region
        %s563 = ssub.s32 %s36, 1
        // Predicated region
        $region13: #{tpu_custom_call.1} parent=11 // pred_check
          %p564 = pneg %p161
        $region14: #{tpu_custom_call.1} parent=11 // pred_check_branch
          %566 = sbr.rel (%p564) target = $region16
        $region15: #{tpu_custom_call.1} parent=11 // pred_region
          _
        $region16: #{tpu_custom_call.1} parent=11 // pred_fallthru
          _
        // Predicated region
        $region17: #{tpu_custom_call.1} parent=11 // pred_check
          %p567 = pneg %p182
        $region18: #{tpu_custom_call.1} parent=11 // pred_check_branch
          %569 = sbr.rel (%p567) target = $region20
        $region19: #{tpu_custom_call.1} parent=11 // pred_region
          _
        $region20: #{tpu_custom_call.1} parent=11 // pred_fallthru
          _
        // Predicated region
        $region21: #{tpu_custom_call.1} parent=11 // pred_check
          %p570 = pneg %p203
        $region22: #{tpu_custom_call.1} parent=11 // pred_check_branch
          %572 = sbr.rel (%p570) target = $region24
        $region23: #{tpu_custom_call.1} parent=11 // pred_region
          _
        $region24: #{tpu_custom_call.1} parent=11 // pred_fallthru
          _
        // Predicated region
        $region25: #{tpu_custom_call.1} parent=11 // pred_check
          %p573 = pneg %p224
        $region26: #{tpu_custom_call.1} parent=11 // pred_check_branch
          %575 = sbr.rel (%p573) target = $region28
        $region27: #{tpu_custom_call.1} parent=11 // pred_region
          _
        $region28: #{tpu_custom_call.1} parent=11 // pred_fallthru
          _
        // Predicated region
        $region29: #{tpu_custom_call.1} parent=11 // pred_check
          %p576 = pneg %p245
        $region30: #{tpu_custom_call.1} parent=11 // pred_check_branch
          %578 = sbr.rel (%p576) target = $region32
        $region31: #{tpu_custom_call.1} parent=11 // pred_region
          _
        $region32: #{tpu_custom_call.1} parent=11 // pred_fallthru
          _
        // Predicated region
        $region33: #{tpu_custom_call.1} parent=11 // pred_check
          %p579 = pneg %p266
        $region34: #{tpu_custom_call.1} parent=11 // pred_check_branch
          %581 = sbr.rel (%p579) target = $region36
        $region35: #{tpu_custom_call.1} parent=11 // pred_region
          _
        $region36: #{tpu_custom_call.1} parent=11 // pred_fallthru
          _
        // Predicated region
        $region37: #{tpu_custom_call.1} parent=11 // pred_check
          %p582 = pneg %p287
        $region38: #{tpu_custom_call.1} parent=11 // pred_check_branch
          %584 = sbr.rel (%p582) target = $region40
        $region39: #{tpu_custom_call.1} parent=11 // pred_region
          _
        $region40: #{tpu_custom_call.1} parent=11 // pred_fallthru
          _
        // Predicated region
        $region41: #{tpu_custom_call.1} parent=11 // pred_check
          %p585 = pneg %p308
        $region42: #{tpu_custom_call.1} parent=11 // pred_check_branch
          %587 = sbr.rel (%p585) target = $region44
        $region43: #{tpu_custom_call.1} parent=11 // pred_region
          _
        $region44: #{tpu_custom_call.1} parent=11 // pred_fallthru
          _
        // Predicated region
        $region45: #{tpu_custom_call.1} parent=11 // pred_check
          %p588 = pneg %p329
        $region46: #{tpu_custom_call.1} parent=11 // pred_check_branch
          %590 = sbr.rel (%p588) target = $region48
        $region47: #{tpu_custom_call.1} parent=11 // pred_region
          _
        $region48: #{tpu_custom_call.1} parent=11 // pred_fallthru
          _
        // Predicated region
        $region49: #{tpu_custom_call.1} parent=11 // pred_check
          %p591 = pneg %p350
        $region50: #{tpu_custom_call.1} parent=11 // pred_check_branch
          %593 = sbr.rel (%p591) target = $region52
        $region51: #{tpu_custom_call.1} parent=11 // pred_region
          _
        $region52: #{tpu_custom_call.1} parent=11 // pred_fallthru
          _
        // Predicated region
        $region53: #{tpu_custom_call.1} parent=11 // pred_check
          %p594 = pneg %p371
        $region54: #{tpu_custom_call.1} parent=11 // pred_check_branch
          %596 = sbr.rel (%p594) target = $region56
        $region55: #{tpu_custom_call.1} parent=11 // pred_region
          _
        $region56: #{tpu_custom_call.1} parent=11 // pred_fallthru
          _
        // Predicated region
        $region57: #{tpu_custom_call.1} parent=11 // pred_check
          %p597 = pneg %p392
        $region58: #{tpu_custom_call.1} parent=11 // pred_check_branch
          %599 = sbr.rel (%p597) target = $region60
        $region59: #{tpu_custom_call.1} parent=11 // pred_region
          _
        $region60: #{tpu_custom_call.1} parent=11 // pred_fallthru
          _
        // Predicated region
        $region61: #{tpu_custom_call.1} parent=11 // pred_check
          %p600 = pneg %p413
        $region62: #{tpu_custom_call.1} parent=11 // pred_check_branch
          %602 = sbr.rel (%p600) target = $region64
        $region63: #{tpu_custom_call.1} parent=11 // pred_region
          _
        $region64: #{tpu_custom_call.1} parent=11 // pred_fallthru
          _
        // Predicated region
        $region65: #{tpu_custom_call.1} parent=11 // pred_check
          %p603 = pneg %p434
        $region66: #{tpu_custom_call.1} parent=11 // pred_check_branch
          %605 = sbr.rel (%p603) target = $region68
        $region67: #{tpu_custom_call.1} parent=11 // pred_region
          _
        $region68: #{tpu_custom_call.1} parent=11 // pred_fallthru
          _
        // Predicated region
        $region69: #{tpu_custom_call.1} parent=11 // pred_check
          %p606 = pneg %p455
        $region70: #{tpu_custom_call.1} parent=11 // pred_check_branch
          %608 = sbr.rel (%p606) target = $region72
        $region71: #{tpu_custom_call.1} parent=11 // pred_region
          _
        $region72: #{tpu_custom_call.1} parent=11 // pred_fallthru
          _
      $region12: #{tpu_custom_call.1} parent=5 // pred_fallthru
        _
      %p609 = scmp.lt.s32.totalorder %s36, 2
      // Predicated region
      $region73: #{tpu_custom_call.1} parent=5 // pred_check
        %p610 = pneg %p609
      $region74: #{tpu_custom_call.1} parent=5 // pred_check_branch
        %612 = sbr.rel (%p610) target = $region76
      $region75: #{tpu_custom_call.1} parent=5 // pred_region
        // Predicated region
        $region77: #{tpu_custom_call.1} parent=75 // pred_check
          %p613 = pneg %p56
        $region78: #{tpu_custom_call.1} parent=75 // pred_check_branch
          %615 = sbr.rel (%p613) target = $region80
        $region79: #{tpu_custom_call.1} parent=75 // pred_region
          %s616 = smul.u32 2, %s36
          %p617 = scmp.lt.s32.totalorder %s616, 3
          %s618 = scalar_select %p617, %s616, 3
          %s619 = smul.addr %s618, 8
          %s620 = scalar_lea.vmem %s0, %s619
          %s621 = smul.u32 2, %s36
        $region80: #{tpu_custom_call.1} parent=75 // pred_fallthru
          _
        // Predicated region
        $region81: #{tpu_custom_call.1} parent=75 // pred_check
          %p622 = pneg %p82
        $region82: #{tpu_custom_call.1} parent=75 // pred_check_branch
          %624 = sbr.rel (%p622) target = $region84
        $region83: #{tpu_custom_call.1} parent=75 // pred_region
          %s625 = smul.u32 2, %s36
          %p626 = scmp.lt.s32.totalorder %s625, 3
          %s627 = scalar_select %p626, %s625, 3
          %s628 = smul.addr %s627, 4
          %s629 = scalar_lea.vmem %s1, %s628
          %s630 = smul.u32 2, %s36
        $region84: #{tpu_custom_call.1} parent=75 // pred_fallthru
          _
        // Predicated region
        $region85: #{tpu_custom_call.1} parent=75 // pred_check
          %p631 = pneg %p108
        $region86: #{tpu_custom_call.1} parent=75 // pred_check_branch
          %633 = sbr.rel (%p631) target = $region88
        $region87: #{tpu_custom_call.1} parent=75 // pred_region
          %s634 = smul.u32 2, %s36
          %p635 = scmp.lt.s32.totalorder %s634, 3
          %s636 = scalar_select %p635, %s634, 3
          %s637 = smul.addr %s636, 4
          %s638 = scalar_lea.vmem %s2, %s637
          %s639 = smul.u32 2, %s36
        $region88: #{tpu_custom_call.1} parent=75 // pred_fallthru
          _
        // Predicated region
        $region89: #{tpu_custom_call.1} parent=75 // pred_check
          %p640 = pneg %p134
        $region90: #{tpu_custom_call.1} parent=75 // pred_check_branch
          %642 = sbr.rel (%p640) target = $region92
        $region91: #{tpu_custom_call.1} parent=75 // pred_region
          %s643 = smul.u32 2, %s36
          %p644 = scmp.lt.s32.totalorder %s643, 3
          %s645 = scalar_select %p644, %s643, 3
          %s646 = smul.addr %s645, 8
          %s647 = scalar_lea.vmem %s3, %s646
          %s648 = smul.u32 2, %s36
        $region92: #{tpu_custom_call.1} parent=75 // pred_fallthru
          _
      $region76: #{tpu_custom_call.1} parent=5 // pred_fallthru
        _
      %p649 = scmp.le.s32.totalorder 1, %s36
      %p650 = scmp.lt.s32.totalorder %s36, 3
      %p651 = pnand %p649, %p650
      %p652 = pneg %p651
      // Predicated region
      $region93: #{tpu_custom_call.1} parent=5 // pred_check
        _
      $region94: #{tpu_custom_call.1} parent=5 // pred_check_branch
        %654 = sbr.rel (%p651) target = $region96
      $region95: #{tpu_custom_call.1} parent=5 // pred_region
        %s655 = ssub.s32 %s36, 1
        %s656 = smul.u32 2, %s41
        %p657 = scmp.lt.s32.totalorder %s656, 3
        %s658 = scalar_select %p657, %s656, 3
        %s659 = smul.addr %s658, 8
        %s660 = scalar_lea.vmem %s0, %s659
        %p661 = pneg %p62
        %p662 = pneg %p59
        %s663 = smul.u32 2, %s41
        %p664 = scmp.lt.s32.totalorder %s663, 3
        %s665 = scalar_select %p664, %s663, 3
        %s666 = smul.addr %s665, 4
        %s667 = scalar_lea.vmem %s1, %s666
        %p668 = pneg %p88
        %p669 = pneg %p85
        %s670 = smul.u32 2, %s41
        %p671 = scmp.lt.s32.totalorder %s670, 3
        %s672 = scalar_select %p671, %s670, 3
        %s673 = smul.addr %s672, 4
        %s674 = scalar_lea.vmem %s2, %s673
        %p675 = pneg %p114
        %p676 = pneg %p111
        %s677 = smul.u32 2, %s41
        %p678 = scmp.lt.s32.totalorder %s677, 3
        %s679 = scalar_select %p678, %s677, 3
        %s680 = smul.addr %s679, 8
        %s681 = scalar_lea.vmem %s3, %s680
        %p682 = pneg %p140
        %p683 = pneg %p137
        %p684 = pneg %p161
        %p685 = pneg %p158
        %p686 = pneg %p182
        %p687 = pneg %p179
        %p688 = pneg %p203
        %p689 = pneg %p200
        %p690 = pneg %p224
        %p691 = pneg %p221
        %p692 = pneg %p245
        %p693 = pneg %p242
        %p694 = pneg %p266
        %p695 = pneg %p263
        %p696 = pneg %p287
        %p697 = pneg %p284
        %p698 = pneg %p308
        %p699 = pneg %p305
        %p700 = pneg %p329
        %p701 = pneg %p326
        %p702 = pneg %p350
        %p703 = pneg %p347
        %p704 = pneg %p371
        %p705 = pneg %p368
        %p706 = pneg %p392
        %p707 = pneg %p389
        %p708 = pneg %p413
        %p709 = pneg %p410
        %p710 = pneg %p434
        %p711 = pneg %p431
        %p712 = pneg %p455
        %p713 = pneg %p452
        %p714 = pneg %p481
        %p715 = pneg %p478
        %s716 = sand.u32 %s468, 1
        %s717 = scalar_lea.sflag [#allocation7], %s716
        %s718 = sand.u32 %s468, 1
        %s719 = smul.addr %s718, 16
        %s720 = scalar_lea.vmem [#allocation6], %s719
        %p721 = pneg %p507
        %p722 = pneg %p504
        %s723 = sand.u32 %s41, 1
        %s724 = scalar_lea.sflag [#allocation9], %s723
        %s725 = sand.u32 %s494, 1
        %s726 = smul.addr %s725, 16
        %s727 = scalar_lea.vmem [#allocation8], %s726
        %p728 = pneg %p528
        %p729 = pneg %p525
        %p730 = pneg %p549
        %p731 = pneg %p546
        %s732 = smul.u32 2, %s41
        %p733 = scmp.lt.s32.totalorder %s732, 3
        %s734 = scalar_select %p733, %s732, 3
        %s735 = smul.addr %s734, 8
        %s736 = scalar_lea.vmem %s0, %s735
        %s737 = smul.u32 2, %s41
        %s738 = smul.u32 2, %s41
        %p739 = scmp.lt.s32.totalorder %s738, 3
        %s740 = scalar_select %p739, %s738, 3
        %s741 = smul.addr %s740, 4
        %s742 = scalar_lea.vmem %s1, %s741
        %s743 = smul.u32 2, %s41
        %s744 = smul.u32 2, %s41
        %p745 = scmp.lt.s32.totalorder %s744, 3
        %s746 = scalar_select %p745, %s744, 3
        %s747 = smul.addr %s746, 4
        %s748 = scalar_lea.vmem %s2, %s747
        %s749 = smul.u32 2, %s41
        %s750 = smul.u32 2, %s41
        %p751 = scmp.lt.s32.totalorder %s750, 3
        %s752 = scalar_select %p751, %s750, 3
        %s753 = smul.addr %s752, 8
        %s754 = scalar_lea.vmem %s3, %s753
        %s755 = smul.u32 2, %s41
        %s756 = smul.u32 2, %s41
        %s757 = smul.u32 2, %s41
        %p759 = scmp.eq.s32.totalorder %s41, 0
        // Predicated region
        $region97: #{tpu_custom_call.1} parent=95 // pred_check
          %p760 = pneg %p759
        $region98: #{tpu_custom_call.1} parent=95 // pred_check_branch
          %762 = sbr.rel (%p760) target = $region100
        $region99: #{tpu_custom_call.1} parent=95 // pred_region
          %v763 = vld [vmem:[%s4] sm:$0xff]
          %v764 = vld [vmem:[%s4 + $0x8] sm:$0xff]
          %v765 = vld [vmem:[%s10] sm:$0xff]
          %v766 = vld [vmem:[%s10 + $0x8] sm:$0xff]
          %v767 = vld [vmem:[%s10 + $0x10] sm:$0xff]
          %v768 = vld [vmem:[%s10 + $0x18] sm:$0xff]
          %v769 = vld [vmem:[%s11] sm:$0x1]
          %v771 = vlaneseq
          %v772 = vshrl.u32 %v771, 7
          %v773 = vsub.s32 0, %v772
          %v774 = vrot.slane %v769, %v773
          %vm776 = vcmask 261120
          %v778 = vsel %vm776, %v763, 0
          %v781 = vsel %vm776, %v764, 0
          %783 = vmatprep.subr.mxu0 0.0
          %784 = vmatpush1.msra.mxu0 %v765
          %785 = vmatprep.subr.mxu0 0.0
          %786 = vmatpush1.msra.mxu0 %v766
          %787 = vmatprep.subr.mxu0 0.0
          %788 = vmatpush1.msra.mxu0 %v767
          %789 = vmatprep.subr.mxu0 0.0
          %790 = vmatpush1.msra.mxu0 %v768
          %791 = vmatprep.subr.mxu0 0.0
          %792 = vmatpush1.msra.mxu0 0.0
          %793 = vmatprep.subr.mxu0 0.0
          %794 = vmatpush1.msra.mxu0 0.0
          %795 = vmatprep.subr.mxu0 0.0
          %796 = vmatpush1.msra.mxu0 0.0
          %797 = vmatprep.subr.mxu0 0.0
          %798 = vmatpush1.msra.mxu0 0.0
          %799 = vmatprep.subr.mxu0 0.0
          %800 = vmatpush1.msra.mxu0 0.0
          %801 = vmatprep.subr.mxu0 0.0
          %802 = vmatpush1.msra.mxu0 0.0
          %803 = vmatprep.subr.mxu0 0.0
          %804 = vmatpush1.msra.mxu0 0.0
          %805 = vmatprep.subr.mxu0 0.0
          %806 = vmatpush1.msra.mxu0 0.0
          %807 = vmatprep.subr.mxu0 0.0
          %808 = vmatpush1.msra.mxu0 0.0
          %809 = vmatprep.subr.mxu0 0.0
          %810 = vmatpush1.msra.mxu0 0.0
          %811 = vmatprep.subr.mxu0 0.0
          %812 = vmatpush1.msra.mxu0 0.0
          %813 = vmatprep.subr.mxu0 0.0
          %814 = vmatpush1.msra.mxu0 0.0
          %815 = vmatprep.subr.mxu0 0.0
          %816 = vmatpush1.msra.mxu0 0.0
          %817 = vmatprep.subr.mxu0 0.0
          %818 = vmatpush1.msra.mxu0 0.0
          %819 = vmatprep.subr.mxu0 0.0
          %820 = vmatpush1.msra.mxu0 0.0
          %821 = vmatprep.subr.mxu0 0.0
          %822 = vmatpush1.msra.mxu0 0.0
          %823 = vmatprep.subr.mxu0 0.0
          %824 = vmatpush1.msra.mxu0 0.0
          %825 = vmatprep.subr.mxu0 0.0
          %826 = vmatpush1.msra.mxu0 0.0
          %827 = vmatprep.subr.mxu0 0.0
          %828 = vmatpush1.msra.mxu0 0.0
          %829 = vmatprep.subr.mxu0 0.0
          %830 = vmatpush1.msra.mxu0 0.0
          %831 = vmatprep.subr.mxu0 0.0
          %832 = vmatpush1.msra.mxu0 0.0
          %833 = vmatprep.subr.mxu0 0.0
          %834 = vmatpush1.msra.mxu0 0.0
          %835 = vmatprep.subr.mxu0 0.0
          %836 = vmatpush1.msra.mxu0 0.0
          %837 = vmatprep.subr.mxu0 0.0
          %838 = vmatpush1.msra.mxu0 0.0
          %839 = vmatprep.subr.mxu0 0.0
          %840 = vmatpush1.msra.mxu0 0.0
          %841 = vmatprep.subr.mxu0 0.0
          %842 = vmatpush1.msra.mxu0 0.0
          %843 = vmatprep.subr.mxu0 0.0
          %844 = vmatpush1.msra.mxu0 0.0
          %845 = vmatprep.subr.mxu0 0.0
          %846 = vmatpush1.msra.mxu0 0.0
          %847 = vmatprep.mubr.f32.mxu0 0.0
          %848 = vmatmul.mubr.f32.gmra.mrb[0].mxu0 %v778
          %v849 = vpop.f32.mrb[0].mxu0
          %v850 = vadd.f32 %v774, %v849
          %v851 = vpop.f32.mrb[0].mxu0
          %852 = vmatprep.mubr.f32.mxu0 0.0
          %853 = vmatmul.mubr.f32.gmra.mrb[0].mxu0 %v781
          %v854 = vpop.f32.mrb[0].mxu0
          %v855 = vadd.f32 %v774, %v854
          %v856 = vpop.f32.mrb[0].mxu0
          %857 = vdwg.mxu0
          %v858 = vpack.c.bf16 %v855, %v850
          %859 = vst [vmem:[#allocation2] sm:$0xff] %v858
          %862 = vrot.lane.b32.xlu0 %v850, 32
          %v863 = vpop.permute.xlu0 %862
          %864 = vrot.lane.b32.xlu0 %v855, 32
          %v865 = vpop.permute.xlu0 %864
          %868 = vst.msk [vmem:[#allocation3] sm:$0xff] %vm776, %v863
          %869 = vst.msk [vmem:[#allocation3 + $0x8] sm:$0xff] %vm776, %v865
          %870 = vst.msk [vmem:[#allocation4] sm:$0xff] %vm776, 0.0
          %871 = vst.msk [vmem:[#allocation4 + $0x8] sm:$0xff] %vm776, 0.0
          %vm872 = vcmask 517120
          %873 = vst.msk [vmem:[#allocation5] sm:$0x3] %vm872, 0.0
        $region100: #{tpu_custom_call.1} parent=95 // pred_fallthru
          _
        %v874 = vld [vmem:[%s736] sm:$0xff]
        %v875 = vld [vmem:[%s736 + $0x8] sm:$0xff]
        %v876 = vld [vmem:[%s8] sm:$0xff]
        %v877 = vld [vmem:[%s9] sm:$0x1]
        %v879 = vlaneseq
        %v880 = vshrl.u32 %v879, 7
        %v881 = vsub.s32 0, %v880
        %v882 = vrot.slane %v877, %v881
        %vm884 = vcmask 64512
        %v886 = vsel %vm884, %v874, 0
        %v889 = vsel %vm884, %v875, 0
        %891 = vmatprep.subr.mxu0 0.0
        %892 = vmatpush1.msra.mxu0 %v876
        %893 = vmatprep.subr.mxu0 0.0
        %894 = vmatpush1.msra.mxu0 0.0
        %895 = vmatprep.subr.mxu0 0.0
        %896 = vmatpush1.msra.mxu0 0.0
        %897 = vmatprep.subr.mxu0 0.0
        %898 = vmatpush1.msra.mxu0 0.0
        %899 = vmatprep.subr.mxu0 0.0
        %900 = vmatpush1.msra.mxu0 0.0
        %901 = vmatprep.subr.mxu0 0.0
        %902 = vmatpush1.msra.mxu0 0.0
        %903 = vmatprep.subr.mxu0 0.0
        %904 = vmatpush1.msra.mxu0 0.0
        %905 = vmatprep.subr.mxu0 0.0
        %906 = vmatpush1.msra.mxu0 0.0
        %907 = vmatprep.subr.mxu0 0.0
        %908 = vmatpush1.msra.mxu0 0.0
        %909 = vmatprep.subr.mxu0 0.0
        %910 = vmatpush1.msra.mxu0 0.0
        %911 = vmatprep.subr.mxu0 0.0
        %912 = vmatpush1.msra.mxu0 0.0
        %913 = vmatprep.subr.mxu0 0.0
        %914 = vmatpush1.msra.mxu0 0.0
        %915 = vmatprep.subr.mxu0 0.0
        %916 = vmatpush1.msra.mxu0 0.0
        %917 = vmatprep.subr.mxu0 0.0
        %918 = vmatpush1.msra.mxu0 0.0
        %919 = vmatprep.subr.mxu0 0.0
        %920 = vmatpush1.msra.mxu0 0.0
        %921 = vmatprep.subr.mxu0 0.0
        %922 = vmatpush1.msra.mxu0 0.0
        %923 = vmatprep.subr.mxu0 0.0
        %924 = vmatpush1.msra.mxu0 0.0
        %925 = vmatprep.subr.mxu0 0.0
        %926 = vmatpush1.msra.mxu0 0.0
        %927 = vmatprep.subr.mxu0 0.0
        %928 = vmatpush1.msra.mxu0 0.0
        %929 = vmatprep.subr.mxu0 0.0
        %930 = vmatpush1.msra.mxu0 0.0
        %931 = vmatprep.subr.mxu0 0.0
        %932 = vmatpush1.msra.mxu0 0.0
        %933 = vmatprep.subr.mxu0 0.0
        %934 = vmatpush1.msra.mxu0 0.0
        %935 = vmatprep.subr.mxu0 0.0
        %936 = vmatpush1.msra.mxu0 0.0
        %937 = vmatprep.subr.mxu0 0.0
        %938 = vmatpush1.msra.mxu0 0.0
        %939 = vmatprep.subr.mxu0 0.0
        %940 = vmatpush1.msra.mxu0 0.0
        %941 = vmatprep.subr.mxu0 0.0
        %942 = vmatpush1.msra.mxu0 0.0
        %943 = vmatprep.subr.mxu0 0.0
        %944 = vmatpush1.msra.mxu0 0.0
        %945 = vmatprep.subr.mxu0 0.0
        %946 = vmatpush1.msra.mxu0 0.0
        %947 = vmatprep.subr.mxu0 0.0
        %948 = vmatpush1.msra.mxu0 0.0
        %949 = vmatprep.subr.mxu0 0.0
        %950 = vmatpush1.msra.mxu0 0.0
        %951 = vmatprep.subr.mxu0 0.0
        %952 = vmatpush1.msra.mxu0 0.0
        %953 = vmatprep.subr.mxu0 0.0
        %954 = vmatpush1.msra.mxu0 0.0
        %955 = vmatprep.mubr.f32.mxu0 0.0
        %956 = vmatmul.mubr.f32.gmra.mrb[0].mxu0 %v886
        %v957 = vpop.f32.mrb[0].mxu0
        %v958 = vadd.f32 %v882, %v957
        %v959 = vpop.f32.mrb[0].mxu0
        %960 = vmatprep.mubr.f32.mxu0 0.0
        %961 = vmatmul.mubr.f32.gmra.mrb[0].mxu0 %v889
        %v962 = vpop.f32.mrb[0].mxu0
        %v963 = vadd.f32 %v882, %v962
        %v964 = vpop.f32.mrb[0].mxu0
        %965 = vdwg.mxu0
        %v966 = vld [vmem:[#allocation2] sm:$0xff]
        %v967 = vld [vmem:[%s742] sm:$0xf]
        %v968 = vld [vmem:[%s742 + $0x4] sm:$0xf]
        %v971 = vunpack.c.l.b16 %v967
        %v972 = vunpack.c.l.b16 %v968
        %v973 = vpack.c.b16 %v972, %v971
        %vm974 = vcmask 130048
        %v976 = vsel %vm974, %v973, 0
        %978 = vmatprep.subr.bf16.mxu0 0
        %979 = vmatpush1.bf16.msra.mxu0 %v966
        %980 = vmatprep.subr.bf16.mxu0 0
        %981 = vmatpush1.bf16.msra.mxu0 0
        %982 = vmatprep.subr.bf16.mxu0 0
        %983 = vmatpush1.bf16.msra.mxu0 0
        %984 = vmatprep.subr.bf16.mxu0 0
        %985 = vmatpush1.bf16.msra.mxu0 0
        %986 = vmatprep.subr.bf16.mxu0 0
        %987 = vmatpush1.bf16.msra.mxu0 0
        %988 = vmatprep.subr.bf16.mxu0 0
        %989 = vmatpush1.bf16.msra.mxu0 0
        %990 = vmatprep.subr.bf16.mxu0 0
        %991 = vmatpush1.bf16.msra.mxu0 0
        %992 = vmatprep.subr.bf16.mxu0 0
        %993 = vmatpush1.bf16.msra.mxu0 0
        %994 = vmatprep.subr.bf16.mxu0 0
        %995 = vmatpush1.bf16.msra.mxu0 0
        %996 = vmatprep.subr.bf16.mxu0 0
        %997 = vmatpush1.bf16.msra.mxu0 0
        %998 = vmatprep.subr.bf16.mxu0 0
        %999 = vmatpush1.bf16.msra.mxu0 0
        %1000 = vmatprep.subr.bf16.mxu0 0
        %1001 = vmatpush1.bf16.msra.mxu0 0
        %1002 = vmatprep.subr.bf16.mxu0 0
        %1003 = vmatpush1.bf16.msra.mxu0 0
        %1004 = vmatprep.subr.bf16.mxu0 0
        %1005 = vmatpush1.bf16.msra.mxu0 0
        %1006 = vmatprep.subr.bf16.mxu0 0
        %1007 = vmatpush1.bf16.msra.mxu0 0
        %1008 = vmatprep.subr.bf16.mxu0 0
        %1009 = vmatpush1.bf16.msra.mxu0 0
        %1010 = vmatprep.mubr.bf16.mxu0 0
        %1011 = vmatmul.mubr.bf16.gmra.mrb[0].mxu0 %v976
        %v1012 = vpop.f32.mrb[0].mxu0
        %v1013 = vadd.f32 0.0, %v1012
        %v1014 = vpop.f32.mrb[0].mxu0
        %v1015 = vpop.f32.mrb[0].mxu0
        %v1016 = vadd.f32 0.0, %v1015
        %v1017 = vpop.f32.mrb[0].mxu0
        %1018 = vdwg.mxu0
        %v1019 = vld [vmem:[%s748] sm:$0xf]
        %v1020 = vld [vmem:[%s748 + $0x4] sm:$0xf]
        %v1023 = vunpack.c.l.b16 %v1019
        %v1024 = vunpack.c.l.b16 %v1020
        %v1025 = vpack.c.b16 %v1024, %v1023
        %v1027 = vsel %vm974, %v1025, 0
        %1029 = vmatprep.subr.bf16.mxu0 0
        %1030 = vmatpush1.bf16.msra.mxu0 %v966
        %1031 = vmatprep.subr.bf16.mxu0 0
        %1032 = vmatpush1.bf16.msra.mxu0 0
        %1033 = vmatprep.subr.bf16.mxu0 0
        %1034 = vmatpush1.bf16.msra.mxu0 0
        %1035 = vmatprep.subr.bf16.mxu0 0
        %1036 = vmatpush1.bf16.msra.mxu0 0
        %1037 = vmatprep.subr.bf16.mxu0 0
        %1038 = vmatpush1.bf16.msra.mxu0 0
        %1039 = vmatprep.subr.bf16.mxu0 0
        %1040 = vmatpush1.bf16.msra.mxu0 0
        %1041 = vmatprep.subr.bf16.mxu0 0
        %1042 = vmatpush1.bf16.msra.mxu0 0
        %1043 = vmatprep.subr.bf16.mxu0 0
        %1044 = vmatpush1.bf16.msra.mxu0 0
        %1045 = vmatprep.subr.bf16.mxu0 0
        %1046 = vmatpush1.bf16.msra.mxu0 0
        %1047 = vmatprep.subr.bf16.mxu0 0
        %1048 = vmatpush1.bf16.msra.mxu0 0
        %1049 = vmatprep.subr.bf16.mxu0 0
        %1050 = vmatpush1.bf16.msra.mxu0 0
        %1051 = vmatprep.subr.bf16.mxu0 0
        %1052 = vmatpush1.bf16.msra.mxu0 0
        %1053 = vmatprep.subr.bf16.mxu0 0
        %1054 = vmatpush1.bf16.msra.mxu0 0
        %1055 = vmatprep.subr.bf16.mxu0 0
        %1056 = vmatpush1.bf16.msra.mxu0 0
        %1057 = vmatprep.subr.bf16.mxu0 0
        %1058 = vmatpush1.bf16.msra.mxu0 0
        %1059 = vmatprep.subr.bf16.mxu0 0
        %1060 = vmatpush1.bf16.msra.mxu0 0
        %1061 = vmatprep.mubr.bf16.mxu0 0
        %1062 = vmatmul.mubr.bf16.gmra.mrb[0].mxu0 %v1027
        %v1063 = vpop.f32.mrb[0].mxu0
        %v1064 = vadd.f32 0.0, %v1063
        %v1065 = vpop.f32.mrb[0].mxu0
        %v1066 = vpop.f32.mrb[0].mxu0
        %v1067 = vadd.f32 0.0, %v1066
        %v1068 = vpop.f32.mrb[0].mxu0
        %1069 = vdwg.mxu0
        %1072 = vrot.lane.b32.xlu0 %v1013, 32
        %v1073 = vpop.permute.xlu0 %1072
        %1074 = vrot.lane.b32.xlu0 %v1016, 32
        %v1075 = vpop.permute.xlu0 %1074
        %v1078 = vadd.f32 %v958, %v1073
        %v1079 = vadd.f32 %v963, %v1075
        %v1080 = vadd.f32 %v1078, %v1064
        %v1081 = vadd.f32 %v1079, %v1067
        %v1082 = vxor.u32 %v1080, 2147483648
        %v1083 = vxor.u32 %v1081, 2147483648
        %v1084 = vmul.f32 %v1082, 1.442695
        %v1085 = vpow.pop %v1084
        %v1086 = vmul.f32 %v1083, 1.442695
        %v1087 = vpow.pop %v1086
        %v1088 = vadd.f32 %v1085, 1.0
        %v1089 = vadd.f32 %v1087, 1.0
        %v1090 = vrcp.pop %v1088
        %v1091 = vmul.f32 1.0, %v1090
        %v1092 = vrcp.pop %v1089
        %v1093 = vmul.f32 1.0, %v1092
        %1096 = vrot.lane.b32.xlu0 %v1091, 32
        %v1097 = vpop.permute.xlu0 %1096
        %1098 = vrot.lane.b32.xlu0 %v1093, 32
        %v1099 = vpop.permute.xlu0 %1098
        %v1102 = vmul.f32 %v1064, %v1097
        %v1103 = vmul.f32 %v1067, %v1099
        %v1104 = vpack.c.bf16 %v1103, %v1102
        %v1105 = vld [vmem:[#allocation4] sm:$0xff]
        %v1106 = vld [vmem:[#allocation4 + $0x8] sm:$0xff]
        %1108 = vxpose.xlu0.c.b16.start [1/8] %v973, 128
        %1109 = vxpose.xlu0.c.b16.cont [2/8] 0, 128
        %1110 = vxpose.xlu0.c.b16.cont [3/8] 0, 128
        %1111 = vxpose.xlu0.c.b16.cont [4/8] 0, 128
        %1112 = vxpose.xlu0.c.b16.cont [5/8] 0, 128
        %1113 = vxpose.xlu0.c.b16.cont [6/8] 0, 128
        %1114 = vxpose.xlu0.c.b16.cont [7/8] 0, 128
        %1115 = vxpose.xlu0.c.b16.end [8/8] 0, 128
        %v1116 = vpop.trf.xlu0
        %v1117 = vpop.trf.xlu0
        %v1118 = vpop.trf.xlu0
        %v1119 = vpop.trf.xlu0
        %v1120 = vpop.trf.xlu0
        %v1121 = vpop.trf.xlu0
        %v1122 = vpop.trf.xlu0
        %v1123 = vpop.trf.xlu0
        %1125 = vrot.lane.b32.xlu0 %v1104, 64
        %v1126 = vpop.permute.xlu0 %1125
        %v1129 = vsel %vm974, %v1116, 0
        %1131 = vmatprep.subr.bf16.mxu0 0
        %1132 = vmatpush1.bf16.msra.mxu0 %v1126
        %1133 = vmatprep.subr.bf16.mxu0 0
        %1134 = vmatpush1.bf16.msra.mxu0 0
        %1135 = vmatprep.subr.bf16.mxu0 0
        %1136 = vmatpush1.bf16.msra.mxu0 0
        %1137 = vmatprep.subr.bf16.mxu0 0
        %1138 = vmatpush1.bf16.msra.mxu0 0
        %1139 = vmatprep.subr.bf16.mxu0 0
        %1140 = vmatpush1.bf16.msra.mxu0 0
        %1141 = vmatprep.subr.bf16.mxu0 0
        %1142 = vmatpush1.bf16.msra.mxu0 0
        %1143 = vmatprep.subr.bf16.mxu0 0
        %1144 = vmatpush1.bf16.msra.mxu0 0
        %1145 = vmatprep.subr.bf16.mxu0 0
        %1146 = vmatpush1.bf16.msra.mxu0 0
        %1147 = vmatprep.subr.bf16.mxu0 0
        %1148 = vmatpush1.bf16.msra.mxu0 0
        %1149 = vmatprep.subr.bf16.mxu0 0
        %1150 = vmatpush1.bf16.msra.mxu0 0
        %1151 = vmatprep.subr.bf16.mxu0 0
        %1152 = vmatpush1.bf16.msra.mxu0 0
        %1153 = vmatprep.subr.bf16.mxu0 0
        %1154 = vmatpush1.bf16.msra.mxu0 0
        %1155 = vmatprep.subr.bf16.mxu0 0
        %1156 = vmatpush1.bf16.msra.mxu0 0
        %1157 = vmatprep.subr.bf16.mxu0 0
        %1158 = vmatpush1.bf16.msra.mxu0 0
        %1159 = vmatprep.subr.bf16.mxu0 0
        %1160 = vmatpush1.bf16.msra.mxu0 0
        %1161 = vmatprep.subr.bf16.mxu0 0
        %1162 = vmatpush1.bf16.msra.mxu0 0
        %1163 = vmatprep.mubr.bf16.mxu0 0
        %1164 = vmatmul.mubr.bf16.gmra.mrb[0].mxu0 %v1129
        %v1165 = vpop.f32.mrb[0].mxu0
        %v1166 = vadd.f32 0.0, %v1165
        %v1167 = vpop.f32.mrb[0].mxu0
        %v1168 = vpop.f32.mrb[0].mxu0
        %v1169 = vadd.f32 0.0, %v1168
        %v1170 = vpop.f32.mrb[0].mxu0
        %1171 = vdwg.mxu0
        %v1172 = vadd.f32 %v1105, %v1166
        %v1173 = vadd.f32 %v1106, %v1169
        %vm1174 = vcmask 261120
        %1175 = vst.msk [vmem:[#allocation4] sm:$0xff] %vm1174, %v1172
        %1176 = vst.msk [vmem:[#allocation4 + $0x8] sm:$0xff] %vm1174, %v1173
        %v1177 = vld [vmem:[#allocation5] sm:$0x3]
        %v1178 = vld [vmem:[%s754] sm:$0xff]
        %v1179 = vld [vmem:[%s754 + $0x8] sm:$0xff]
        %v1180 = vmul.f32 %v1080, %v1080
        %v1181 = vmul.f32 %v1081, %v1081
        %1184 = vrot.lane.b32.xlu0 %v1080, 96
        %v1185 = vpop.permute.xlu0 %1184
        %1186 = vrot.lane.b32.xlu0 %v1081, 96
        %v1187 = vpop.permute.xlu0 %1186
        %v1190 = vsel %vm1174, %v1185, %v1180
        %v1191 = vsel %vm1174, %v1187, %v1181
        %1192 = vxpose.xlu0.b32.start [1/16] %v1178, 128
        %1193 = vxpose.xlu0.b32.cont [2/16] %v1179, 128
        %1194 = vxpose.xlu0.b32.cont [3/16] 0.0, 128
        %1195 = vxpose.xlu0.b32.cont [4/16] 0.0, 128
        %1196 = vxpose.xlu0.b32.cont [5/16] 0.0, 128
        %1197 = vxpose.xlu0.b32.cont [6/16] 0.0, 128
        %1198 = vxpose.xlu0.b32.cont [7/16] 0.0, 128
        %1199 = vxpose.xlu0.b32.cont [8/16] 0.0, 128
        %1200 = vxpose.xlu0.b32.cont [9/16] 0.0, 128
        %1201 = vxpose.xlu0.b32.cont [10/16] 0.0, 128
        %1202 = vxpose.xlu0.b32.cont [11/16] 0.0, 128
        %1203 = vxpose.xlu0.b32.cont [12/16] 0.0, 128
        %1204 = vxpose.xlu0.b32.cont [13/16] 0.0, 128
        %1205 = vxpose.xlu0.b32.cont [14/16] 0.0, 128
        %1206 = vxpose.xlu0.b32.cont [15/16] 0.0, 128
        %1207 = vxpose.xlu0.b32.end [16/16] 0.0, 128
        %v1208 = vpop.trf.xlu0
        %v1209 = vpop.trf.xlu0
        %v1210 = vpop.trf.xlu0
        %v1211 = vpop.trf.xlu0
        %v1212 = vpop.trf.xlu0
        %v1213 = vpop.trf.xlu0
        %v1214 = vpop.trf.xlu0
        %v1215 = vpop.trf.xlu0
        %v1216 = vpop.trf.xlu0
        %v1217 = vpop.trf.xlu0
        %v1218 = vpop.trf.xlu0
        %v1219 = vpop.trf.xlu0
        %v1220 = vpop.trf.xlu0
        %v1221 = vpop.trf.xlu0
        %v1222 = vpop.trf.xlu0
        %v1223 = vpop.trf.xlu0
        %v1225 = vsel %vm974, %v1208, 0
        %1227 = vmatprep.subr.mxu0 0.0
        %1228 = vmatpush1.msra.mxu0 %v1190
        %1229 = vmatprep.subr.mxu0 0.0
        %1230 = vmatpush1.msra.mxu0 %v1191
        %1231 = vmatprep.subr.mxu0 0.0
        %1232 = vmatpush1.msra.mxu0 0.0
        %1233 = vmatprep.subr.mxu0 0.0
        %1234 = vmatpush1.msra.mxu0 0.0
        %1235 = vmatprep.subr.mxu0 0.0
        %1236 = vmatpush1.msra.mxu0 0.0
        %1237 = vmatprep.subr.mxu0 0.0
        %1238 = vmatpush1.msra.mxu0 0.0
        %1239 = vmatprep.subr.mxu0 0.0
        %1240 = vmatpush1.msra.mxu0 0.0
        %1241 = vmatprep.subr.mxu0 0.0
        %1242 = vmatpush1.msra.mxu0 0.0
        %1243 = vmatprep.subr.mxu0 0.0
        %1244 = vmatpush1.msra.mxu0 0.0
        %1245 = vmatprep.subr.mxu0 0.0
        %1246 = vmatpush1.msra.mxu0 0.0
        %1247 = vmatprep.subr.mxu0 0.0
        %1248 = vmatpush1.msra.mxu0 0.0
        %1249 = vmatprep.subr.mxu0 0.0
        %1250 = vmatpush1.msra.mxu0 0.0
        %1251 = vmatprep.subr.mxu0 0.0
        %1252 = vmatpush1.msra.mxu0 0.0
        %1253 = vmatprep.subr.mxu0 0.0
        %1254 = vmatpush1.msra.mxu0 0.0
        %1255 = vmatprep.subr.mxu0 0.0
        %1256 = vmatpush1.msra.mxu0 0.0
        %1257 = vmatprep.subr.mxu0 0.0
        %1258 = vmatpush1.msra.mxu0 0.0
        %1259 = vmatprep.subr.mxu0 0.0
        %1260 = vmatpush1.msra.mxu0 0.0
        %1261 = vmatprep.subr.mxu0 0.0
        %1262 = vmatpush1.msra.mxu0 0.0
        %1263 = vmatprep.subr.mxu0 0.0
        %1264 = vmatpush1.msra.mxu0 0.0
        %1265 = vmatprep.subr.mxu0 0.0
        %1266 = vmatpush1.msra.mxu0 0.0
        %1267 = vmatprep.subr.mxu0 0.0
        %1268 = vmatpush1.msra.mxu0 0.0
        %1269 = vmatprep.subr.mxu0 0.0
        %1270 = vmatpush1.msra.mxu0 0.0
        %1271 = vmatprep.subr.mxu0 0.0
        %1272 = vmatpush1.msra.mxu0 0.0
        %1273 = vmatprep.subr.mxu0 0.0
        %1274 = vmatpush1.msra.mxu0 0.0
        %1275 = vmatprep.subr.mxu0 0.0
        %1276 = vmatpush1.msra.mxu0 0.0
        %1277 = vmatprep.subr.mxu0 0.0
        %1278 = vmatpush1.msra.mxu0 0.0
        %1279 = vmatprep.subr.mxu0 0.0
        %1280 = vmatpush1.msra.mxu0 0.0
        %1281 = vmatprep.subr.mxu0 0.0
        %1282 = vmatpush1.msra.mxu0 0.0
        %1283 = vmatprep.subr.mxu0 0.0
        %1284 = vmatpush1.msra.mxu0 0.0
        %1285 = vmatprep.subr.mxu0 0.0
        %1286 = vmatpush1.msra.mxu0 0.0
        %1287 = vmatprep.subr.mxu0 0.0
        %1288 = vmatpush1.msra.mxu0 0.0
        %1289 = vmatprep.subr.mxu0 0.0
        %1290 = vmatpush1.msra.mxu0 0.0
        %1291 = vmatprep.mubr.f32.mxu0 0.0
        %1292 = vmatmul.mubr.f32.gmra.mrb[0].mxu0 %v1225
        %v1293 = vpop.f32.mrb[0].mxu0
        %v1294 = vadd.f32 0.0, %v1293
        %v1295 = vpop.f32.mrb[0].mxu0
        %1296 = vdwg.mxu0
        %v1297 = vadd.f32 %v1177, %v1294
        %vm1298 = vcmask 517120
        %1299 = vst.msk [vmem:[#allocation5] sm:$0x3] %vm1298, %v1297
        %1300 = vst.msk [vmem:[%s720] sm:$0xff] %vm1174, %v1185
        %1301 = vst.msk [vmem:[%s720 + $0x8] sm:$0xff] %vm1174, %v1187
        %1302 = vst.msk [vmem:[%s727] sm:$0xff] %vm1174, %v958
        %1303 = vst.msk [vmem:[%s727 + $0x8] sm:$0xff] %vm1174, %v963
        %p1304 = scmp.eq.s32.totalorder %s41, 1
        // Predicated region
        $region101: #{tpu_custom_call.1} parent=95 // pred_check
          %p1305 = pneg %p1304
        $region102: #{tpu_custom_call.1} parent=95 // pred_check_branch
          %1307 = sbr.rel (%p1305) target = $region104
        $region103: #{tpu_custom_call.1} parent=95 // pred_region
          %v1308 = vld [vmem:[#allocation3] sm:$0xff]
          %v1309 = vld [vmem:[#allocation3 + $0x8] sm:$0xff]
          %v1310 = vld [vmem:[#allocation4] sm:$0xff]
          %v1311 = vld [vmem:[#allocation4 + $0x8] sm:$0xff]
          %v1312 = vadd.f32 %v1308, %v1310
          %v1313 = vadd.f32 %v1309, %v1311
          %v1314 = vld [vmem:[%s6] sm:$0xff]
          %v1315 = vld [vmem:[%s6 + $0x8] sm:$0xff]
          %v1316 = vmul.f32 %v1312, %v1312
          %v1317 = vmul.f32 %v1313, %v1313
          %1320 = vrot.lane.b32.xlu0 %v1316, 32
          %v1321 = vpop.permute.xlu0 %1320
          %1322 = vrot.lane.b32.xlu0 %v1317, 32
          %v1323 = vpop.permute.xlu0 %1322
          %v1326 = vsel %vm1174, %v1312, %v1321
          %v1327 = vsel %vm1174, %v1313, %v1323
          %1328 = vxpose.xlu0.b32.start [1/16] %v1314, 128
          %1329 = vxpose.xlu0.b32.cont [2/16] %v1315, 128
          %1330 = vxpose.xlu0.b32.cont [3/16] 0.0, 128
          %1331 = vxpose.xlu0.b32.cont [4/16] 0.0, 128
          %1332 = vxpose.xlu0.b32.cont [5/16] 0.0, 128
          %1333 = vxpose.xlu0.b32.cont [6/16] 0.0, 128
          %1334 = vxpose.xlu0.b32.cont [7/16] 0.0, 128
          %1335 = vxpose.xlu0.b32.cont [8/16] 0.0, 128
          %1336 = vxpose.xlu0.b32.cont [9/16] 0.0, 128
          %1337 = vxpose.xlu0.b32.cont [10/16] 0.0, 128
          %1338 = vxpose.xlu0.b32.cont [11/16] 0.0, 128
          %1339 = vxpose.xlu0.b32.cont [12/16] 0.0, 128
          %1340 = vxpose.xlu0.b32.cont [13/16] 0.0, 128
          %1341 = vxpose.xlu0.b32.cont [14/16] 0.0, 128
          %1342 = vxpose.xlu0.b32.cont [15/16] 0.0, 128
          %1343 = vxpose.xlu0.b32.end [16/16] 0.0, 128
          %v1344 = vpop.trf.xlu0
          %v1345 = vpop.trf.xlu0
          %v1346 = vpop.trf.xlu0
          %v1347 = vpop.trf.xlu0
          %v1348 = vpop.trf.xlu0
          %v1349 = vpop.trf.xlu0
          %v1350 = vpop.trf.xlu0
          %v1351 = vpop.trf.xlu0
          %v1352 = vpop.trf.xlu0
          %v1353 = vpop.trf.xlu0
          %v1354 = vpop.trf.xlu0
          %v1355 = vpop.trf.xlu0
          %v1356 = vpop.trf.xlu0
          %v1357 = vpop.trf.xlu0
          %v1358 = vpop.trf.xlu0
          %v1359 = vpop.trf.xlu0
          %v1361 = vsel %vm974, %v1344, 0
          %1363 = vmatprep.subr.mxu0 0.0
          %1364 = vmatpush1.msra.mxu0 %v1326
          %1365 = vmatprep.subr.mxu0 0.0
          %1366 = vmatpush1.msra.mxu0 %v1327
          %1367 = vmatprep.subr.mxu0 0.0
          %1368 = vmatpush1.msra.mxu0 0.0
          %1369 = vmatprep.subr.mxu0 0.0
          %1370 = vmatpush1.msra.mxu0 0.0
          %1371 = vmatprep.subr.mxu0 0.0
          %1372 = vmatpush1.msra.mxu0 0.0
          %1373 = vmatprep.subr.mxu0 0.0
          %1374 = vmatpush1.msra.mxu0 0.0
          %1375 = vmatprep.subr.mxu0 0.0
          %1376 = vmatpush1.msra.mxu0 0.0
          %1377 = vmatprep.subr.mxu0 0.0
          %1378 = vmatpush1.msra.mxu0 0.0
          %1379 = vmatprep.subr.mxu0 0.0
          %1380 = vmatpush1.msra.mxu0 0.0
          %1381 = vmatprep.subr.mxu0 0.0
          %1382 = vmatpush1.msra.mxu0 0.0
          %1383 = vmatprep.subr.mxu0 0.0
          %1384 = vmatpush1.msra.mxu0 0.0
          %1385 = vmatprep.subr.mxu0 0.0
          %1386 = vmatpush1.msra.mxu0 0.0
          %1387 = vmatprep.subr.mxu0 0.0
          %1388 = vmatpush1.msra.mxu0 0.0
          %1389 = vmatprep.subr.mxu0 0.0
          %1390 = vmatpush1.msra.mxu0 0.0
          %1391 = vmatprep.subr.mxu0 0.0
          %1392 = vmatpush1.msra.mxu0 0.0
          %1393 = vmatprep.subr.mxu0 0.0
          %1394 = vmatpush1.msra.mxu0 0.0
          %1395 = vmatprep.subr.mxu0 0.0
          %1396 = vmatpush1.msra.mxu0 0.0
          %1397 = vmatprep.subr.mxu0 0.0
          %1398 = vmatpush1.msra.mxu0 0.0
          %1399 = vmatprep.subr.mxu0 0.0
          %1400 = vmatpush1.msra.mxu0 0.0
          %1401 = vmatprep.subr.mxu0 0.0
          %1402 = vmatpush1.msra.mxu0 0.0
          %1403 = vmatprep.subr.mxu0 0.0
          %1404 = vmatpush1.msra.mxu0 0.0
          %1405 = vmatprep.subr.mxu0 0.0
          %1406 = vmatpush1.msra.mxu0 0.0
          %1407 = vmatprep.subr.mxu0 0.0
          %1408 = vmatpush1.msra.mxu0 0.0
          %1409 = vmatprep.subr.mxu0 0.0
          %1410 = vmatpush1.msra.mxu0 0.0
          %1411 = vmatprep.subr.mxu0 0.0
          %1412 = vmatpush1.msra.mxu0 0.0
          %1413 = vmatprep.subr.mxu0 0.0
          %1414 = vmatpush1.msra.mxu0 0.0
          %1415 = vmatprep.subr.mxu0 0.0
          %1416 = vmatpush1.msra.mxu0 0.0
          %1417 = vmatprep.subr.mxu0 0.0
          %1418 = vmatpush1.msra.mxu0 0.0
          %1419 = vmatprep.subr.mxu0 0.0
          %1420 = vmatpush1.msra.mxu0 0.0
          %1421 = vmatprep.subr.mxu0 0.0
          %1422 = vmatpush1.msra.mxu0 0.0
          %1423 = vmatprep.subr.mxu0 0.0
          %1424 = vmatpush1.msra.mxu0 0.0
          %1425 = vmatprep.subr.mxu0 0.0
          %1426 = vmatpush1.msra.mxu0 0.0
          %1427 = vmatprep.mubr.f32.mxu0 0.0
          %1428 = vmatmul.mubr.f32.gmra.mrb[0].mxu0 %v1361
          %v1429 = vpop.f32.mrb[0].mxu0
          %v1430 = vadd.f32 0.0, %v1429
          %v1431 = vpop.f32.mrb[0].mxu0
          %1432 = vdwg.mxu0
          %v1433 = vld [vmem:[%s14] sm:$0x1]
          %v1435 = vlaneseq
          %v1436 = vshrl.u32 %v1435, 7
          %v1437 = vsub.s32 0, %v1436
          %v1438 = vrot.slane %v1433, %v1437
          %v1440 = vmul.f32 %v1438, %v1430
          %v1441 = vmul.f32 %v1440, 2.0
          %v1442 = vmul.f32 %v1441, %v1430
          %1444 = vrot.lane.b32.xlu0 %v1442, 32
          %v1445 = vpop.permute.xlu0 %1444
          %v1447 = vsub.f32 %v1430, %v1445
          %v1448 = vmul.f32 %v1440, %v1440
          %1450 = vrot.lane.b32.xlu0 %v1448, 32
          %v1451 = vpop.permute.xlu0 %1450
          %v1453 = vadd.f32 %v1447, %v1451
          %v1454 = vld [vmem:[%s12] sm:$0x1]
          %v1455 = vadd.f32 %v1453, 1e-05
          %v1456 = vrsqrt.pop %v1455
          %v1458 = vlaneseq
          %v1459 = vshrl.u32 %v1458, 7
          %v1460 = vsub.s32 0, %v1459
          %v1461 = vrot.slane %v1454, %v1460
          %1464 = vrot.lane.b32.xlu0 %v1456, 96
          %v1465 = vpop.permute.xlu0 %1464
          %v1467 = vmul.f32 %v1461, %v1465
          %v1468 = vld [vmem:[%s5] sm:$0xff]
          %v1469 = vld [vmem:[%s5 + $0x8] sm:$0xff]
          %1471 = vrot.lane.b32.xlu0 %v1467, 32
          %v1472 = vpop.permute.xlu0 %1471
          %v1474 = vsel %vm1174, %v1440, %v1472
          %vm1475 = vcmask 15360
          %v1477 = vsel %vm1475, %v1468, 0
          %v1480 = vsel %vm1475, %v1469, 0
          %vm1482 = vcmask 1041408
          %v1484 = vsel %vm1482, %v1474, 0
          %1486 = vmatprep.subr.mxu0 0.0
          %1487 = vmatpush1.msra.mxu0 %v1484
          %1488 = vmatprep.subr.mxu0 0.0
          %1489 = vmatpush1.msra.mxu0 0.0
          %1490 = vmatprep.subr.mxu0 0.0
          %1491 = vmatpush1.msra.mxu0 0.0
          %1492 = vmatprep.subr.mxu0 0.0
          %1493 = vmatpush1.msra.mxu0 0.0
          %1494 = vmatprep.subr.mxu0 0.0
          %1495 = vmatpush1.msra.mxu0 0.0
          %1496 = vmatprep.subr.mxu0 0.0
          %1497 = vmatpush1.msra.mxu0 0.0
          %1498 = vmatprep.subr.mxu0 0.0
          %1499 = vmatpush1.msra.mxu0 0.0
          %1500 = vmatprep.subr.mxu0 0.0
          %1501 = vmatpush1.msra.mxu0 0.0
          %1502 = vmatprep.subr.mxu0 0.0
          %1503 = vmatpush1.msra.mxu0 0.0
          %1504 = vmatprep.subr.mxu0 0.0
          %1505 = vmatpush1.msra.mxu0 0.0
          %1506 = vmatprep.subr.mxu0 0.0
          %1507 = vmatpush1.msra.mxu0 0.0
          %1508 = vmatprep.subr.mxu0 0.0
          %1509 = vmatpush1.msra.mxu0 0.0
          %1510 = vmatprep.subr.mxu0 0.0
          %1511 = vmatpush1.msra.mxu0 0.0
          %1512 = vmatprep.subr.mxu0 0.0
          %1513 = vmatpush1.msra.mxu0 0.0
          %1514 = vmatprep.subr.mxu0 0.0
          %1515 = vmatpush1.msra.mxu0 0.0
          %1516 = vmatprep.subr.mxu0 0.0
          %1517 = vmatpush1.msra.mxu0 0.0
          %1518 = vmatprep.subr.mxu0 0.0
          %1519 = vmatpush1.msra.mxu0 0.0
          %1520 = vmatprep.subr.mxu0 0.0
          %1521 = vmatpush1.msra.mxu0 0.0
          %1522 = vmatprep.subr.mxu0 0.0
          %1523 = vmatpush1.msra.mxu0 0.0
          %1524 = vmatprep.subr.mxu0 0.0
          %1525 = vmatpush1.msra.mxu0 0.0
          %1526 = vmatprep.subr.mxu0 0.0
          %1527 = vmatpush1.msra.mxu0 0.0
          %1528 = vmatprep.subr.mxu0 0.0
          %1529 = vmatpush1.msra.mxu0 0.0
          %1530 = vmatprep.subr.mxu0 0.0
          %1531 = vmatpush1.msra.mxu0 0.0
          %1532 = vmatprep.subr.mxu0 0.0
          %1533 = vmatpush1.msra.mxu0 0.0
          %1534 = vmatprep.subr.mxu0 0.0
          %1535 = vmatpush1.msra.mxu0 0.0
          %1536 = vmatprep.subr.mxu0 0.0
          %1537 = vmatpush1.msra.mxu0 0.0
          %1538 = vmatprep.subr.mxu0 0.0
          %1539 = vmatpush1.msra.mxu0 0.0
          %1540 = vmatprep.subr.mxu0 0.0
          %1541 = vmatpush1.msra.mxu0 0.0
          %1542 = vmatprep.subr.mxu0 0.0
          %1543 = vmatpush1.msra.mxu0 0.0
          %1544 = vmatprep.subr.mxu0 0.0
          %1545 = vmatpush1.msra.mxu0 0.0
          %1546 = vmatprep.subr.mxu0 0.0
          %1547 = vmatpush1.msra.mxu0 0.0
          %1548 = vmatprep.subr.mxu0 0.0
          %1549 = vmatpush1.msra.mxu0 0.0
          %1550 = vmatprep.mubr.f32.mxu0 0.0
          %1551 = vmatmul.mubr.f32.gmra.mrb[0].mxu0 %v1477
          %v1552 = vpop.f32.mrb[0].mxu0
          %v1553 = vadd.f32 0.0, %v1552
          %v1554 = vpop.f32.mrb[0].mxu0
          %1555 = vmatprep.mubr.f32.mxu0 0.0
          %1556 = vmatmul.mubr.f32.gmra.mrb[0].mxu0 %v1480
          %v1557 = vpop.f32.mrb[0].mxu0
          %v1558 = vadd.f32 0.0, %v1557
          %v1559 = vpop.f32.mrb[0].mxu0
          %1560 = vdwg.mxu0
          %v1561 = vsub.f32 %v1312, %v1553
          %v1562 = vsub.f32 %v1313, %v1558
          %1565 = vrot.lane.b32.xlu0 %v1553, 96
          %v1566 = vpop.permute.xlu0 %1565
          %1567 = vrot.lane.b32.xlu0 %v1558, 96
          %v1568 = vpop.permute.xlu0 %1567
          %v1571 = vmul.f32 %v1561, %v1566
          %v1572 = vmul.f32 %v1562, %v1568
          %v1573 = vld [vmem:[%s13] sm:$0x1]
          %v1575 = vlaneseq
          %v1576 = vshrl.u32 %v1575, 7
          %v1577 = vsub.s32 0, %v1576
          %v1578 = vrot.slane %v1573, %v1577
          %v1580 = vadd.f32 %v1571, %v1578
          %v1581 = vadd.f32 %v1572, %v1578
          %v1582 = vld [vmem:[%s4] sm:$0xff]
          %v1583 = vld [vmem:[%s4 + $0x8] sm:$0xff]
          %v1584 = vmax.f32 %v1580, 0.0
          %v1585 = vmax.f32 %v1581, 0.0
          %v1586 = vadd.f32 %v1582, %v1584
          %v1587 = vadd.f32 %v1583, %v1585
          %1588 = vst.msk [vmem:[#allocation10] sm:$0xff] %vm1174, %v1586
          %1589 = vst.msk [vmem:[#allocation10 + $0x8] sm:$0xff] %vm1174, %v1587
          %v1590 = vld [vmem:[#allocation5] sm:$0x3]
          %v1591 = vld [vmem:[%s16] sm:$0x1]
          %v1593 = vlaneseq
          %v1594 = vshrl.u32 %v1593, 7
          %v1595 = vsub.s32 0, %v1594
          %v1596 = vrot.slane %v1591, %v1595
          %v1598 = vmul.f32 %v1596, %v1590
          %v1599 = vmul.f32 %v1598, 2.0
          %v1600 = vmul.f32 %v1599, %v1590
          %1602 = vrot.lane.b32.xlu0 %v1600, 32
          %v1603 = vpop.permute.xlu0 %1602
          %v1605 = vsub.f32 %v1590, %v1603
          %v1606 = vmul.f32 %v1598, %v1598
          %1608 = vrot.lane.b32.xlu0 %v1606, 32
          %v1609 = vpop.permute.xlu0 %1608
          %v1611 = vadd.f32 %v1605, %v1609
          %v1612 = vld [vmem:[%s15] sm:$0x1]
          %v1613 = vadd.f32 %v1611, 1e-05
          %v1614 = vrsqrt.pop %v1613
          %v1616 = vlaneseq
          %v1617 = vshrl.u32 %v1616, 7
          %v1618 = vsub.s32 0, %v1617
          %v1619 = vrot.slane %v1612, %v1618
          %1622 = vrot.lane.b32.xlu0 %v1614, 96
          %v1623 = vpop.permute.xlu0 %1622
          %v1625 = vmul.f32 %v1619, %v1623
          %v1626 = vld [vmem:[%s7] sm:$0x3]
          %v1627 = vmax.f32 %v1626, 0.0
          %v1628 = vld [vmem:[%s17] sm:$0xff]
          %v1629 = vld [vmem:[%s17 + $0x8] sm:$0xff]
          %v1630 = vld [vmem:[%s18] sm:$0x1]
          %v1632 = vlaneseq
          %v1633 = vshrl.u32 %v1632, 7
          %v1634 = vsub.s32 0, %v1633
          %v1635 = vrot.slane %v1630, %v1634
          %v1638 = vsel %vm974, %v1627, 0
          %1640 = vmatprep.subr.mxu0 0.0
          %1641 = vmatpush1.msra.mxu0 %v1628
          %1642 = vmatprep.subr.mxu0 0.0
          %1643 = vmatpush1.msra.mxu0 %v1629
          %1644 = vmatprep.subr.mxu0 0.0
          %1645 = vmatpush1.msra.mxu0 0.0
          %1646 = vmatprep.subr.mxu0 0.0
          %1647 = vmatpush1.msra.mxu0 0.0
          %1648 = vmatprep.subr.mxu0 0.0
          %1649 = vmatpush1.msra.mxu0 0.0
          %1650 = vmatprep.subr.mxu0 0.0
          %1651 = vmatpush1.msra.mxu0 0.0
          %1652 = vmatprep.subr.mxu0 0.0
          %1653 = vmatpush1.msra.mxu0 0.0
          %1654 = vmatprep.subr.mxu0 0.0
          %1655 = vmatpush1.msra.mxu0 0.0
          %1656 = vmatprep.subr.mxu0 0.0
          %1657 = vmatpush1.msra.mxu0 0.0
          %1658 = vmatprep.subr.mxu0 0.0
          %1659 = vmatpush1.msra.mxu0 0.0
          %1660 = vmatprep.subr.mxu0 0.0
          %1661 = vmatpush1.msra.mxu0 0.0
          %1662 = vmatprep.subr.mxu0 0.0
          %1663 = vmatpush1.msra.mxu0 0.0
          %1664 = vmatprep.subr.mxu0 0.0
          %1665 = vmatpush1.msra.mxu0 0.0
          %1666 = vmatprep.subr.mxu0 0.0
          %1667 = vmatpush1.msra.mxu0 0.0
          %1668 = vmatprep.subr.mxu0 0.0
          %1669 = vmatpush1.msra.mxu0 0.0
          %1670 = vmatprep.subr.mxu0 0.0
          %1671 = vmatpush1.msra.mxu0 0.0
          %1672 = vmatprep.subr.mxu0 0.0
          %1673 = vmatpush1.msra.mxu0 0.0
          %1674 = vmatprep.subr.mxu0 0.0
          %1675 = vmatpush1.msra.mxu0 0.0
          %1676 = vmatprep.subr.mxu0 0.0
          %1677 = vmatpush1.msra.mxu0 0.0
          %1678 = vmatprep.subr.mxu0 0.0
          %1679 = vmatpush1.msra.mxu0 0.0
          %1680 = vmatprep.subr.mxu0 0.0
          %1681 = vmatpush1.msra.mxu0 0.0
          %1682 = vmatprep.subr.mxu0 0.0
          %1683 = vmatpush1.msra.mxu0 0.0
          %1684 = vmatprep.subr.mxu0 0.0
          %1685 = vmatpush1.msra.mxu0 0.0
          %1686 = vmatprep.subr.mxu0 0.0
          %1687 = vmatpush1.msra.mxu0 0.0
          %1688 = vmatprep.subr.mxu0 0.0
          %1689 = vmatpush1.msra.mxu0 0.0
          %1690 = vmatprep.subr.mxu0 0.0
          %1691 = vmatpush1.msra.mxu0 0.0
          %1692 = vmatprep.subr.mxu0 0.0
          %1693 = vmatpush1.msra.mxu0 0.0
          %1694 = vmatprep.subr.mxu0 0.0
          %1695 = vmatpush1.msra.mxu0 0.0
          %1696 = vmatprep.subr.mxu0 0.0
          %1697 = vmatpush1.msra.mxu0 0.0
          %1698 = vmatprep.subr.mxu0 0.0
          %1699 = vmatpush1.msra.mxu0 0.0
          %1700 = vmatprep.subr.mxu0 0.0
          %1701 = vmatpush1.msra.mxu0 0.0
          %1702 = vmatprep.subr.mxu0 0.0
          %1703 = vmatpush1.msra.mxu0 0.0
          %1704 = vmatprep.mubr.f32.mxu0 0.0
          %1705 = vmatmul.mubr.f32.gmra.mrb[0].mxu0 %v1638
          %v1706 = vpop.f32.mrb[0].mxu0
          %v1707 = vadd.f32 %v1635, %v1706
          %v1708 = vpop.f32.mrb[0].mxu0
          %1709 = vdwg.mxu0
          %1711 = vrot.lane.b32.xlu0 %v1625, 32
          %v1712 = vpop.permute.xlu0 %1711
          %1715 = vrot.lane.b32.xlu0 %v1707, 64
          %v1716 = vpop.permute.xlu0 %1715
          %v1718 = vsel %vm1174, %v1598, %v1712
          %vm1719 = vcmask 523264
          %v1720 = vsel %vm1719, %v1718, %v1716
          %vm1721 = vcmask 779264
          %1722 = vst.msk [vmem:[#allocation11] sm:$0x3] %vm1721, %v1720
        $region104: #{tpu_custom_call.1} parent=95 // pred_fallthru
          _
        %s1723 = sand.u32 %s468, 1
        %s1724 = scalar_lea.sflag [#allocation7], %s1723
        %s1725 = sand.u32 %s468, 1
        %s1726 = smul.addr %s1725, 16
        %s1727 = scalar_lea.vmem [#allocation6], %s1726
        %s1728 = sand.u32 %s41, 1
        %s1729 = scalar_lea.sflag [#allocation9], %s1728
        %s1730 = sand.u32 %s494, 1
        %s1731 = smul.addr %s1730, 16
        %s1732 = scalar_lea.vmem [#allocation8], %s1731
        // Predicated region
        $region105: #{tpu_custom_call.1} parent=95 // pred_check
          %p1733 = pneg %p478
        $region106: #{tpu_custom_call.1} parent=95 // pred_check_branch
          %1735 = sbr.rel (%p1733) target = $region108
        $region107: #{tpu_custom_call.1} parent=95 // pred_region
          %s1736 = smul.u32 2, %s41
          %s1738 = ssub.s32 256, 256
          %1739 = vsyncadd %s1724, %s1738
          %s1740 = smul.addr %s1736, 128
          %s1741 = scalar_lea.hbm %s19, %s1740
          %s1742 = sshll.u32 %s1727, 4
          %s1743 = int_to_ptr.vmem [resolvable:$true] %s1742
          %1748 = dma.vmem_to_hbm [thread:$0]  %s1743, 256, %s1741, %s1724, 128, 128, 8
        $region108: #{tpu_custom_call.1} parent=95 // pred_fallthru
          _
        // Predicated region
        $region109: #{tpu_custom_call.1} parent=95 // pred_check
          %p1749 = pneg %p504
        $region110: #{tpu_custom_call.1} parent=95 // pred_check_branch
          %1751 = sbr.rel (%p1749) target = $region112
        $region111: #{tpu_custom_call.1} parent=95 // pred_region
          %s1752 = smul.u32 2, %s41
          %s1754 = ssub.s32 256, 256
          %1755 = vsyncadd %s1729, %s1754
          %s1756 = smul.addr %s1752, 128
          %s1757 = scalar_lea.hbm %s20, %s1756
          %s1758 = sshll.u32 %s1732, 4
          %s1759 = int_to_ptr.vmem [resolvable:$true] %s1758
          %1764 = dma.vmem_to_hbm [thread:$0]  %s1759, 256, %s1757, %s1729, 128, 128, 8
        $region112: #{tpu_custom_call.1} parent=95 // pred_fallthru
          _
        // Predicated region
        $region113: #{tpu_custom_call.1} parent=95 // pred_check
          %p1765 = pneg %p525
        $region114: #{tpu_custom_call.1} parent=95 // pred_check_branch
          %1767 = sbr.rel (%p1765) target = $region116
        $region115: #{tpu_custom_call.1} parent=95 // pred_region
          %s1769 = ssub.s32 256, 256
          %1770 = vsyncadd [#allocation9], %s1769
          %s1771 = sshll.u32 [#allocation10], 4
          %s1772 = int_to_ptr.vmem [resolvable:$true] %s1771
          %1777 = dma.vmem_to_hbm [thread:$0]  %s1772, 256, %s21, [#allocation9], 128, 128, 8
        $region116: #{tpu_custom_call.1} parent=95 // pred_fallthru
          _
        // Predicated region
        $region117: #{tpu_custom_call.1} parent=95 // pred_check
          %p1778 = pneg %p546
        $region118: #{tpu_custom_call.1} parent=95 // pred_check_branch
          %1780 = sbr.rel (%p1778) target = $region120
        $region119: #{tpu_custom_call.1} parent=95 // pred_region
          %s1782 = ssub.s32 32, 32
          %1783 = vsyncadd [#allocation12], %s1782
          %s1785 = sshll.u32 [#allocation11], 4
          %s1786 = int_to_ptr.vmem [resolvable:$true] %s1785
          %1788 = dma.vmem_to_hbm [thread:$0]  %s1786, 32, %s22, [#allocation12]
        $region120: #{tpu_custom_call.1} parent=95 // pred_fallthru
          _
        // Predicated region
        $region121: #{tpu_custom_call.1} parent=95 // pred_check
          %p1789 = pneg %p525
        $region122: #{tpu_custom_call.1} parent=95 // pred_check_branch
          %1791 = sbr.rel (%p1789) target = $region124
        $region123: #{tpu_custom_call.1} parent=95 // pred_region
          %1792 = dma.done [#allocation9], 256
        $region124: #{tpu_custom_call.1} parent=95 // pred_fallthru
          _
        // Predicated region
        $region125: #{tpu_custom_call.1} parent=95 // pred_check
          %p1793 = pneg %p546
        $region126: #{tpu_custom_call.1} parent=95 // pred_check_branch
          %1795 = sbr.rel (%p1793) target = $region128
        $region127: #{tpu_custom_call.1} parent=95 // pred_region
          %1796 = dma.done [#allocation12], 32
        $region128: #{tpu_custom_call.1} parent=95 // pred_fallthru
          _
      $region96: #{tpu_custom_call.1} parent=5 // pred_fallthru
        _
      %p1797 = scmp.le.s32.totalorder 2, %s36
      // Predicated region
      $region129: #{tpu_custom_call.1} parent=5 // pred_check
        %p1798 = pneg %p1797
      $region130: #{tpu_custom_call.1} parent=5 // pred_check_branch
        %1800 = sbr.rel (%p1798) target = $region132
      $region131: #{tpu_custom_call.1} parent=5 // pred_region
        %s1801 = ssub.s32 %s36, 2
        // Predicated region
        $region133: #{tpu_custom_call.1} parent=131 // pred_check
          %p1802 = pneg %p484
        $region134: #{tpu_custom_call.1} parent=131 // pred_check_branch
          %1804 = sbr.rel (%p1802) target = $region136
        $region135: #{tpu_custom_call.1} parent=131 // pred_region
          %s1805 = sand.u32 %s469, 1
          %s1806 = scalar_lea.sflag [#allocation7], %s1805
          %s1807 = sand.u32 %s469, 1
          %s1808 = smul.addr %s1807, 16
          %s1809 = scalar_lea.vmem [#allocation6], %s1808
          %1810 = dma.done %s1806, 256
        $region136: #{tpu_custom_call.1} parent=131 // pred_fallthru
          _
        // Predicated region
        $region137: #{tpu_custom_call.1} parent=131 // pred_check
          %p1811 = pneg %p510
        $region138: #{tpu_custom_call.1} parent=131 // pred_check_branch
          %1813 = sbr.rel (%p1811) target = $region140
        $region139: #{tpu_custom_call.1} parent=131 // pred_region
          %s1814 = sand.u32 %s42, 1
          %s1815 = scalar_lea.sflag [#allocation9], %s1814
          %s1816 = sand.u32 %s495, 1
          %s1817 = smul.addr %s1816, 16
          %s1818 = scalar_lea.vmem [#allocation8], %s1817
          %1819 = dma.done %s1815, 256
        $region140: #{tpu_custom_call.1} parent=131 // pred_fallthru
          _
      $region132: #{tpu_custom_call.1} parent=5 // pred_fallthru
        _
    $region6: #{tpu_custom_call.1} parent=1 // loop_footer
      %s40 = sadd.s32 1, %s36
    $region7: #{tpu_custom_call.1} parent=1 // loop_footer_branch
      %35 = sbr.rel target = $region3
    $region8: #{tpu_custom_call.1} parent=1 // loop_exit
      _
    %1820 = vsyncpa [#allocation7], 1
    %s1821 = scalar_lea.sflag [#allocation7], 1
    %1822 = vsyncpa %s1821, 1
    %1823 = vsyncpa [#allocation9], 1
    %s1824 = scalar_lea.sflag [#allocation9], 1
    %1825 = vsyncpa %s1824, 1
    %1826 = vsyncpa [#allocation12], 1

</llo_original>
